<compile_context>
chip_gen: v5e
topology: v5e:2x2
jax: 0.10.0
libtpu: 0.0.40
codegen_flags: <defaults>
</compile_context>

<pallas_src>
import functools

import jax
import jax.numpy as jnp
from jax.experimental import pallas as pl
from jax.experimental.pallas import tpu as pltpu

_LANE = 128

# Below this many matmul FLOPs a pallas_call is pure launch overhead; let XLA
# fuse the head (or, better, fuse it into the producing kernel) instead.
_TINY_FLOPS_THRESHOLD = 1 << 18


def _round_up(x, m):
    return (x + m - 1) // m * m


def _sublane(dtype):
    # Native sublane packing: 8 rows for 4-byte, 16 for 2-byte, 32 for 1-byte.
    return max(8, 32 // jnp.dtype(dtype).itemsize)


@functools.lru_cache(maxsize=None)
def _vmem_budget_bytes():
    # ~75% of per-core VMEM (headroom for compiler temporaries / double
    # buffers); conservative fallback assumes v7x-sized (64 MiB) VMEM so a
    # config tuned here also fits the tightest generation.
    try:
        cap = int(pltpu.get_tpu_info().vmem_capacity_bytes)
    except Exception:
        cap = 64 << 20
    return (cap * 3) // 4


def prepare_head_params(w, b):
    """Pad the head's Linear params to a lane-dense output width, ONCE.

    Done at parameter-prep time so the forward hot path never re-pads W/b.
    w: (H, O) (transpose of PyTorch's (O, H) weight); b: (O,) or (1, O).
    Returns (w_pad: (H, O_pad), b_pad: (1, O_pad), O).
    """
    H, O = w.shape
    b = jnp.reshape(b, (1, -1))
    assert b.shape[1] == O, (b.shape, O)
    O_pad = _round_up(max(O, _LANE), _LANE)
    if O_pad != O:
        # TODO(synk): when several heads share a trunk, pack them into one
        # (H, 128*k) weight instead of padding each head separately.
        w = jnp.pad(w, ((0, 0), (0, O_pad - O)))
        b = jnp.pad(b, ((0, 0), (0, O_pad - O)))
    return w, b, O


def init_head_params(key, hidden, out, dtype=jnp.float32):
    """Synthetic init for the wrapped net (nn.Linear(hidden, out)), pre-padded.

    Pass dtype=jnp.bfloat16 to halve the HBM traffic of the bandwidth-bound
    head; the kernel still accumulates in f32 and adds the bias in f32.
    """
    kw, kb = jax.random.split(key)
    bound = 1.0 / float(hidden) ** 0.5
    w = jax.random.uniform(kw, (hidden, out), jnp.float32, -bound, bound).astype(dtype)
    b = jax.random.uniform(kb, (out,), jnp.float32, -bound, bound).astype(dtype)
    return prepare_head_params(w, b)


def _head_kernel(x_ref, w_ref, b_ref, o_ref):
    # x_ref: (tb, H)  w_ref: (H, tn)  b_ref: (1, tn)  o_ref: (tb, tn)
    acc = jnp.dot(x_ref[...], w_ref[...], preferred_element_type=jnp.float32)
    o_ref[...] = (acc + b_ref[...].astype(jnp.float32)).astype(o_ref.dtype)


def _xla_head(x, w, b, out_dim):
    y = jnp.dot(x, w, preferred_element_type=jnp.float32) + b.astype(jnp.float32)
    y = y.astype(x.dtype)
    return y if y.shape[1] == out_dim else y[:, :out_dim]


def base_head_forward(x, params=None, *, force_pallas=False):
    """BaseHead.forward: apply `net` (a linear head) if params given, else identity."""
    if params is None:
        return x  # BaseHead with net=None -> identity.
    if len(params) == 2:
        # Raw (w, b): pad lazily; prefer calling prepare_head_params once outside.
        params = prepare_head_params(*params)
    w, b, O = params

    B, H = x.shape
    Hw, O_pad = w.shape
    assert Hw == H, (Hw, H)
    assert O_pad % _LANE == 0 and O <= O_pad

    if x.dtype != w.dtype:
        # In a real model the trunk already emits activations in the head's
        # dtype; here the cast is one extra pass over x.
        # TODO(synk): fuse this cast into the producing (trunk) kernel.
        x = x.astype(w.dtype)

    # --- tiny-head fast path: skip the Pallas launch entirely -----------------
    if not force_pallas and (2 * B * H * O) < _TINY_FLOPS_THRESHOLD:
        return _xla_head(x, w, b, O)

    # --- Pallas path -----------------------------------------------------------
    itemsize = jnp.dtype(x.dtype).itemsize
    sub = _sublane(x.dtype)
    budget = _vmem_budget_bytes()

    # N tiling: keep the whole padded width resident (W fetched once) unless the
    # W block would crowd v7x's tighter VMEM; then tile at 256 (MXU-native).
    if 2 * H * O_pad * itemsize <= budget // 3:
        tn = O_pad
    elif O_pad % 256 == 0:
        tn = 256
    else:
        tn = _LANE

    # Batch tiling: big tiles amortize the ~0.35us per-step overhead; x is never
    # padded -- tiles are balanced and the partial last tile's OOB rows are
    # dropped on store.  Always >=2 tiles so v7x's two TensorCores both get work.
    max_tb = 1024 if budget >= (72 << 20) else 512  # bigger tiles on v5e/v6e
    if B <= 2 * sub:
        tb = B  # single full-dim tile (no alignment constraint)
    else:
        nt = max(2, pl.cdiv(B, max_tb))
        tb = _round_up(pl.cdiv(B, nt), sub)

    def vmem_est(tb_):
        return (2 * tb_ * H * itemsize        # x tiles (double buffered)
                + 2 * H * tn * itemsize       # w tiles
                + 2 * sub * tn * itemsize     # bias (sublane-padded)
                + 2 * tb_ * tn * itemsize)    # output tiles

    while tb > sub and vmem_est(tb) > budget:
        tb = max(sub, _round_up(tb // 2, sub))
    if vmem_est(tb) > budget:
        # TODO(synk): add a K-tiled accumulator path for extremely large hidden
        # sizes; for now fall back to XLA's matmul.
        return _xla_head(x, w, b, O)

    grid = (pl.cdiv(B, tb), O_pad // tn)
    vmem_limit = int(min(max(2 * vmem_est(tb), 16 << 20), budget))

    out = pl.pallas_call(
        _head_kernel,
        out_shape=jax.ShapeDtypeStruct((B, O_pad), x.dtype),
        grid_spec=pltpu.PrefetchScalarGridSpec(
            num_scalar_prefetch=0,
            grid=grid,
            in_specs=[
                pl.BlockSpec((tb, H), lambda i, j: (i, 0)),   # x (streams over batch)
                pl.BlockSpec((H, tn), lambda i, j: (0, j)),   # w (resident when nn==1)
                pl.BlockSpec((1, tn), lambda i, j: (0, j)),   # bias
            ],
            out_specs=pl.BlockSpec((tb, tn), lambda i, j: (i, j)),
        ),
        compiler_params=pltpu.CompilerParams(
            dimension_semantics=("parallel", "parallel"),
            vmem_limit_bytes=vmem_limit,
        ),
    )(x, w, b)

    if O == O_pad:
        return out
    # TODO(synk): let the consumer take the lane-padded output (or pack several
    # heads into one (H, 128k) weight) to avoid materializing this slice.
    return out[:, :O]


if __name__ == "__main__":
    key = jax.random.PRNGKey(0)
    k_x, k_p, k_x2, k_x3, k_p3 = jax.random.split(key, 5)
    hi = jax.lax.Precision.HIGHEST

    # 1) Canonical value-head shape: batch grid + lane-dense padded output (O=16 -> 128).
    B, H, O = 1024, 1024, 16
    x = jax.random.normal(k_x, (B, H), jnp.float32)
    params = init_head_params(k_p, H, O)
    w_pad, b_pad, _ = params
    y = jax.block_until_ready(base_head_forward(x, params))
    ref = jnp.dot(x, w_pad[:, :O], precision=hi) + b_pad[:, :O]
    assert y.shape == (B, O)
    assert jnp.allclose(y, ref, atol=2e-3, rtol=2e-3), float(jnp.max(jnp.abs(y - ref)))

    # 2) Ragged batch (B=520): no padding/copy of x; the last tile is partial.
    Br = 520
    xr = jax.random.normal(jax.random.fold_in(k_x, 7), (Br, H), jnp.float32)
    yr = jax.block_until_ready(base_head_forward(xr, params))
    refr = jnp.dot(xr, w_pad[:, :O], precision=hi) + b_pad[:, :O]
    assert yr.shape == (Br, O)
    assert jnp.allclose(yr, refr, atol=2e-3, rtol=2e-3)

    # 3) Non-128-multiple output width (O=300 -> O_pad=384); small batch split
    #    into two tiles (both v7x TensorCores busy).
    B3, H3, O3 = 256, 256, 300
    x3 = jax.random.normal(k_x3, (B3, H3), jnp.float32)
    p3 = init_head_params(k_p3, H3, O3)
    y3 = jax.block_until_ready(base_head_forward(x3, p3))
    ref3 = jnp.dot(x3, p3[0][:, :O3], precision=hi) + p3[1][:, :O3]
    assert y3.shape == (B3, O3)
    assert jnp.allclose(y3, ref3, atol=2e-3, rtol=2e-3)

    # 4) bf16 params/activations (halved HBM traffic); f32 accumulation inside.
    pb16 = init_head_params(k_p, H, O, dtype=jnp.bfloat16)
    yb = jax.block_until_ready(base_head_forward(x, pb16))
    xb32 = x.astype(jnp.bfloat16).astype(jnp.float32)
    refb = (jnp.dot(xb32, pb16[0].astype(jnp.float32)[:, :O], precision=hi)
            + pb16[1].astype(jnp.float32)[:, :O])
    assert yb.shape == (B, O) and yb.dtype == jnp.bfloat16
    assert jnp.allclose(yb.astype(jnp.float32), refb, atol=3e-2, rtol=3e-2)

    # 5) Tiny head (8x32x16): XLA fast path; then force the Pallas path to
    #    check padding / small-tile handling.
    Bs, Hs, Os = 8, 32, 16
    xs = jax.random.normal(k_x2, (Bs, Hs), jnp.float32)
    ps = init_head_params(jax.random.fold_in(k_p, 1), Hs, Os)
    ys = jax.block_until_ready(base_head_forward(xs, ps))
    refs = xs @ ps[0][:, :Os] + ps[1][:, :Os]
    assert jnp.allclose(ys, refs, atol=1e-4, rtol=1e-4)
    ys_p = jax.block_until_ready(base_head_forward(xs, ps, force_pallas=True))
    assert ys_p.shape == (Bs, Os)
    assert jnp.allclose(ys_p, refs, atol=1e-4, rtol=1e-4)

    # 6) BaseHead with net=None -> identity.
    y_id = jax.block_until_ready(base_head_forward(x, None))
    assert jnp.array_equal(y_id, x)

    print("KERNEL_OK")
</pallas_src>

<mosaic_0001>
module attributes {stable_mosaic.version = 11 : i64} {
  func.func @_head_kernel(%arg0: i32, %arg1: i32, %arg2: memref<512x1024xf32, #tpu.memory_space<vmem>>, %arg3: memref<1024x128xf32, #tpu.memory_space<vmem>>, %arg4: memref<1x128xf32, #tpu.memory_space<vmem>>, %arg5: memref<512x128xf32, #tpu.memory_space<vmem>>) attributes {dimension_semantics = [#tpu.dimension_semantics<parallel>, #tpu.dimension_semantics<parallel>], iteration_bounds = array<i64: 2, 1>, scalar_prefetch = 0 : i64, scratch_operands = 0 : i64, tpu.core_type = #tpu.core_type<tc>, window_params = [{transform_indices = @transform_0, window_bounds = array<i64: 512, 1024>}, {transform_indices = @transform_1, window_bounds = array<i64: 1024, 128>}, {transform_indices = @transform_2, window_bounds = array<i64: 1, 128>}, {transform_indices = @transform_3, window_bounds = array<i64: 512, 128>}]} {
    %c0 = arith.constant 0 : index
    %c0_0 = arith.constant 0 : index
    %0 = vector.load %arg2[%c0, %c0_0] : memref<512x1024xf32, #tpu.memory_space<vmem>>, vector<512x1024xf32>
    %c0_1 = arith.constant 0 : index
    %c0_2 = arith.constant 0 : index
    %1 = vector.load %arg3[%c0_1, %c0_2] : memref<1024x128xf32, #tpu.memory_space<vmem>>, vector<1024x128xf32>
    %cst = arith.constant dense<0.000000e+00> : vector<512x128xf32>
    %2 = tpu.matmul %0, %1, %cst {dimension_numbers = #tpu.dot_dimension_numbers<[1], [0], [0], [1], [0, 0, 1, 1], [], []>} : vector<512x1024xf32>, vector<1024x128xf32>, vector<512x128xf32> -> vector<512x128xf32>
    %c0_3 = arith.constant 0 : index
    %c0_4 = arith.constant 0 : index
    %3 = vector.load %arg4[%c0_3, %c0_4] : memref<1x128xf32, #tpu.memory_space<vmem>>, vector<1x128xf32>
    %4 = vector.broadcast %3 : vector<1x128xf32> to vector<512x128xf32>
    %5 = arith.addf %2, %4 : vector<512x128xf32>
    %c0_5 = arith.constant 0 : index
    %c0_6 = arith.constant 0 : index
    %6 = vector.load %arg5[%c0_5, %c0_6] : memref<512x128xf32, #tpu.memory_space<vmem>>, vector<512x128xf32>
    tpu.vector_store %arg5[%c0_5, %c0_6], %5 {strides = array<i32>} : memref<512x128xf32, #tpu.memory_space<vmem>>, vector<512x128xf32>,
    return
  }
  func.func @transform_0(%arg0: i32, %arg1: i32) -> (i32, i32) {
    %c0_i32 = arith.constant 0 : i32
    %c0_i32_0 = arith.constant 0 : i32
    return %arg0, %c0_i32 : i32, i32
  }
  func.func @transform_1(%arg0: i32, %arg1: i32) -> (i32, i32) {
    %c0_i32 = arith.constant 0 : i32
    %c0_i32_0 = arith.constant 0 : i32
    return %c0_i32, %arg1 : i32, i32
  }
  func.func @transform_2(%arg0: i32, %arg1: i32) -> (i32, i32) {
    %c0_i32 = arith.constant 0 : i32
    %c0_i32_0 = arith.constant 0 : i32
    return %c0_i32, %arg1 : i32, i32
  }
  func.func @transform_3(%arg0: i32, %arg1: i32) -> (i32, i32) {
    %c0_i32 = arith.constant 0 : i32
    return %arg0, %arg1 : i32, i32
  }
}

</mosaic_0001>

<llo_original>
// kernel: tpu_custom_call.1
$region0: #{tpu_custom_call.1}
  #allocation0 [shape = 'u32[]', space=smem, size = 0x4, offset = 0x4, fixed_abs, tag = 'smem constant byte address 0x4 - core index']
  #allocation1 [shape = 'u32[72,128]{1,0:T(1,128)}', space=vmem, size = 0x9000, scoped, tag = 'internal scratch']
  %s0 = inlined_call_operand.hbm [shape: f32[1024,1024], index: 0, kind: input, shape index: {}]
  %s1 = inlined_call_operand.hbm [shape: f32[1024,128], index: 1, kind: input, shape index: {}]
  %s2 = inlined_call_operand.hbm [shape: f32[1,128], index: 2, kind: input, shape index: {}]
  %s3 = inlined_call_operand.hbm [shape: f32[1024,128], index: 3, kind: output, shape index: {}]
  %s4 = sld [smem:[#allocation0]]
  $region57: #{tpu_custom_call.1} parent=0
    _
  %s6 = ssub.s32 1, %s4
  %s7 = scalar_select 0, %s6, %s4
  $region1: #{tpu_custom_call.1} parent=0
    #allocation2 [shape = 'u8[4194304]{0}', space=vmem, size = 0x400000, scoped, tag = 'input window, operand 0']
    #allocation3 [shape = 's32[2]{0}', space=sflag, size = 0x8, scoped, tag = 'scoped memory for tpu_custom_call.1']
    #allocation4 [shape = 's32[2]{0}', space=sflag, size = 0x8, scoped, tag = 'scoped memory for tpu_custom_call.1']
    #allocation5 [shape = 'u8[524288]{0}', space=vmem, size = 0x80000, scoped, tag = 'input window, operand 1, single buffered']
    #allocation6 [shape = 's32[1]{0}', space=sflag, size = 0x4, scoped, tag = 'scoped memory for tpu_custom_call.1']
    #allocation7 [shape = 'u8[512]{0}', space=vmem, size = 0x400, scoped, tag = 'input window, operand 2, single buffered']
    #allocation8 [shape = 'u8[524288]{0}', space=vmem, size = 0x80000, scoped, tag = 'output window, operand 0']
    %8 = vsyncpa [#allocation3], 0
    %s9 = scalar_lea.sflag [#allocation3], 1
    %10 = vsyncpa %s9, 0
    %11 = vsyncpa [#allocation6], 0
    %12 = vsyncpa [#allocation4], 0
    %s13 = scalar_lea.sflag [#allocation4], 1
    %14 = vsyncpa %s13, 0
    loop: start=0, step=1, limit=4
    $region2: #{tpu_custom_call.1} parent=1 // loop_pre_header
      _
    $region3: #{tpu_custom_call.1} parent=1 // loop_header
      %s16 = sphi 0, %s20
      %p17 = scmp.ge.s32.totalorder %s16, 4
      %s23 = sphi 0, %s35
      %s24 = sphi 0, %s31
      %s25 = sphi 0, %s23
      %s26 = sphi 0, %s24
      %s27 = sphi 0, %s25
      %s28 = sphi 0, %s26
      %s38 = sphi 0, %s40
      %s41 = sphi 0, %s38
      %s42 = sphi 0, %s41
      %s58 = sphi 0, %s42
      %s64 = sphi 0, %s66
      %s67 = sphi 0, %s64
      %s68 = sphi 0, %s67
      %s84 = sphi 0, %s68
      %s90 = sphi 0, %s92
      %s93 = sphi 0, %s90
      %s94 = sphi 0, %s93
      %s110 = sphi 0, %s94
      %s118 = sphi 0, %s120
      %s121 = sphi 0, %s118
      %s122 = sphi 0, %s121
      %s138 = sphi 0, %s122
    $region4: #{tpu_custom_call.1} parent=1 // loop_header_branch
      %19 = sbr.rel (%p17) target = $region8
    $region5: #{tpu_custom_call.1} parent=1 // loop_body
      %s21 = ssub.s32 %s16, 1
      %s22 = ssub.s32 %s16, 2
      %s29 = sadd.s32 1, %s24
      %p30 = scmp.ge.s32.totalorder %s29, 1
      %s31 = scalar_select %p30, 0, %s29
      %s32 = sadd.s32 1, %s23
      %s33 = scalar_select %p30, %s32, %s23
      %p34 = scmp.ge.s32.totalorder %s33, 2
      %s35 = scalar_select %p34, 0, %s33
      %s36 = ssub.s32 %s23, %s35
      %p37 = scmp.eq.s32.totalorder %s36, 0
      %s39 = sadd.s32 %s38, 1
      %s40 = scalar_select %p37, %s38, %s39
      %p43 = pneg %p37
      %p44 = scmp.eq.s32.totalorder %s16, 1
      %p45 = por %p43, %p44
      %p46 = scmp.ne.s32.totalorder %s38, %s41
      %p47 = scmp.eq.s32.totalorder %s16, 0
      %p48 = por %p46, %p47
      %p49 = scmp.ne.s32.totalorder %s38, %s41
      %p50 = scmp.eq.s32.totalorder %s21, 1
      %p51 = por %p49, %p50
      %p52 = scmp.ne.s32.totalorder %s41, %s42
      %p53 = scmp.eq.s32.totalorder %s21, 0
      %p54 = por %p52, %p53
      %p55 = scmp.ne.s32.totalorder %s41, %s42
      %p56 = scmp.eq.s32.totalorder %s22, 1
      %p57 = por %p55, %p56
      %p59 = scmp.ne.s32.totalorder %s42, %s58
      %p60 = scmp.eq.s32.totalorder %s22, 0
      %p61 = por %p59, %p60
      %s62 = ssub.s32 %s24, %s31
      %p63 = scmp.eq.s32.totalorder %s62, 0
      %s65 = sadd.s32 %s64, 1
      %s66 = scalar_select %p63, %s64, %s65
      %p69 = pneg %p63
      %p70 = scmp.eq.s32.totalorder %s16, 1
      %p71 = por %p69, %p70
      %p72 = scmp.ne.s32.totalorder %s64, %s67
      %p73 = scmp.eq.s32.totalorder %s16, 0
      %p74 = por %p72, %p73
      %p75 = scmp.ne.s32.totalorder %s64, %s67
      %p76 = scmp.eq.s32.totalorder %s21, 1
      %p77 = por %p75, %p76
      %p78 = scmp.ne.s32.totalorder %s67, %s68
      %p79 = scmp.eq.s32.totalorder %s21, 0
      %p80 = por %p78, %p79
      %p81 = scmp.ne.s32.totalorder %s67, %s68
      %p82 = scmp.eq.s32.totalorder %s22, 1
      %p83 = por %p81, %p82
      %p85 = scmp.ne.s32.totalorder %s68, %s84
      %p86 = scmp.eq.s32.totalorder %s22, 0
      %p87 = por %p85, %p86
      %s88 = ssub.s32 %s24, %s31
      %p89 = scmp.eq.s32.totalorder %s88, 0
      %s91 = sadd.s32 %s90, 1
      %s92 = scalar_select %p89, %s90, %s91
      %p95 = pneg %p89
      %p96 = scmp.eq.s32.totalorder %s16, 1
      %p97 = por %p95, %p96
      %p98 = scmp.ne.s32.totalorder %s90, %s93
      %p99 = scmp.eq.s32.totalorder %s16, 0
      %p100 = por %p98, %p99
      %p101 = scmp.ne.s32.totalorder %s90, %s93
      %p102 = scmp.eq.s32.totalorder %s21, 1
      %p103 = por %p101, %p102
      %p104 = scmp.ne.s32.totalorder %s93, %s94
      %p105 = scmp.eq.s32.totalorder %s21, 0
      %p106 = por %p104, %p105
      %p107 = scmp.ne.s32.totalorder %s93, %s94
      %p108 = scmp.eq.s32.totalorder %s22, 1
      %p109 = por %p107, %p108
      %p111 = scmp.ne.s32.totalorder %s94, %s110
      %p112 = scmp.eq.s32.totalorder %s22, 0
      %p113 = por %p111, %p112
      %s114 = ssub.s32 %s23, %s35
      %s115 = ssub.s32 %s24, %s31
      %s116 = sor.u32 %s114, %s115
      %p117 = scmp.eq.s32.totalorder %s116, 0
      %s119 = sadd.s32 %s118, 1
      %s120 = scalar_select %p117, %s118, %s119
      %p123 = pneg %p117
      %p124 = scmp.eq.s32.totalorder %s16, 1
      %p125 = por %p123, %p124
      %p126 = scmp.ne.s32.totalorder %s118, %s121
      %p127 = scmp.eq.s32.totalorder %s16, 0
      %p128 = por %p126, %p127
      %p129 = scmp.ne.s32.totalorder %s118, %s121
      %p130 = scmp.eq.s32.totalorder %s21, 1
      %p131 = por %p129, %p130
      %p132 = scmp.ne.s32.totalorder %s121, %s122
      %p133 = scmp.eq.s32.totalorder %s21, 0
      %p134 = por %p132, %p133
      %p135 = scmp.ne.s32.totalorder %s121, %s122
      %p136 = scmp.eq.s32.totalorder %s22, 1
      %p137 = por %p135, %p136
      %p139 = scmp.ne.s32.totalorder %s122, %s138
      %p140 = scmp.eq.s32.totalorder %s22, 0
      %p141 = por %p139, %p140
      %p142 = scmp.le.s32.totalorder 1, %s16
      %p143 = scmp.lt.s32.totalorder %s16, 3
      %p144 = pnand %p142, %p143
      %p145 = pneg %p144
      // Predicated region
      $region9: #{tpu_custom_call.1} parent=5 // pred_check
        _
      $region10: #{tpu_custom_call.1} parent=5 // pred_check_branch
        %147 = sbr.rel (%p144) target = $region12
      $region11: #{tpu_custom_call.1} parent=5 // pred_region
        %s148 = ssub.s32 %s16, 1
        // Predicated region
        $region13: #{tpu_custom_call.1} parent=11 // pred_check
          %p149 = pneg %p80
        $region14: #{tpu_custom_call.1} parent=11 // pred_check_branch
          %151 = sbr.rel (%p149) target = $region16
        $region15: #{tpu_custom_call.1} parent=11 // pred_region
          %153 = vsyncadd [#allocation6], 0
          %s154 = smul.addr %s26, 8
          %s155 = scalar_lea.hbm %s1, %s154
          %s156 = sshll.u32 %s155, 4
          %s157 = int_to_ptr.hbm [resolvable:$true] %s156
          %s158 = sshll.u32 [#allocation5], 4
          %s159 = int_to_ptr.vmem [resolvable:$true] %s158
          %164 = dma.hbm_to_vmem [thread:$0]  %s157, 16384, %s159, [#allocation6], 128, 128, 8
        $region16: #{tpu_custom_call.1} parent=11 // pred_fallthru
          _
        // Predicated region
        $region17: #{tpu_custom_call.1} parent=11 // pred_check
          %p165 = pneg %p106
        $region18: #{tpu_custom_call.1} parent=11 // pred_check_branch
          %167 = sbr.rel (%p165) target = $region20
        $region19: #{tpu_custom_call.1} parent=11 // pred_region
          %169 = vsyncadd [#allocation6], 0
          %s170 = scalar_lea.hbm %s2, %s26
          %s172 = sshll.u32 %s170, 4
          %s173 = int_to_ptr.hbm [resolvable:$true] %s172
          %s174 = sshll.u32 [#allocation7], 4
          %s175 = int_to_ptr.vmem [resolvable:$true] %s174
          %177 = dma.hbm_to_vmem [thread:$0]  %s173, 16, %s175, [#allocation6]
        $region20: #{tpu_custom_call.1} parent=11 // pred_fallthru
          _
      $region12: #{tpu_custom_call.1} parent=5 // pred_fallthru
        _
      %p178 = scmp.lt.s32.totalorder %s16, 2
      // Predicated region
      $region21: #{tpu_custom_call.1} parent=5 // pred_check
        %p179 = pneg %p178
      $region22: #{tpu_custom_call.1} parent=5 // pred_check_branch
        %181 = sbr.rel (%p179) target = $region24
      $region23: #{tpu_custom_call.1} parent=5 // pred_region
        // Predicated region
        $region25: #{tpu_custom_call.1} parent=23 // pred_check
          %p182 = pneg %p48
        $region26: #{tpu_custom_call.1} parent=23 // pred_check_branch
          %184 = sbr.rel (%p182) target = $region28
        $region27: #{tpu_custom_call.1} parent=23 // pred_region
          %s185 = sand.u32 %s38, 1
          %s186 = scalar_lea.sflag [#allocation3], %s185
          %s187 = sand.u32 %s38, 1
          %s188 = smul.addr %s187, 4096
          %s189 = scalar_lea.vmem [#allocation2], %s188
          %s190 = smul.u32 64, %s23
          %192 = vsyncadd %s186, 0
          %s193 = smul.addr %s190, 8
          %s194 = smul.addr %s193, 8
          %s195 = scalar_lea.hbm %s0, %s194
          %s196 = sshll.u32 %s195, 4
          %s197 = int_to_ptr.hbm [resolvable:$true] %s196
          %s198 = sshll.u32 %s189, 4
          %s199 = int_to_ptr.vmem [resolvable:$true] %s198
          %204 = dma.hbm_to_vmem [thread:$0]  %s197, 65536, %s199, %s186, 1024, 1024, 64
        $region28: #{tpu_custom_call.1} parent=23 // pred_fallthru
          _
      $region24: #{tpu_custom_call.1} parent=5 // pred_fallthru
        _
      %p205 = scmp.le.s32.totalorder 1, %s16
      %p206 = scmp.lt.s32.totalorder %s16, 3
      %p207 = pnand %p205, %p206
      %p208 = pneg %p207
      // Predicated region
      $region29: #{tpu_custom_call.1} parent=5 // pred_check
        _
      $region30: #{tpu_custom_call.1} parent=5 // pred_check_branch
        %210 = sbr.rel (%p207) target = $region32
      $region31: #{tpu_custom_call.1} parent=5 // pred_region
        %s211 = ssub.s32 %s16, 1
        %s212 = sand.u32 %s41, 1
        %s213 = scalar_lea.sflag [#allocation3], %s212
        %s214 = sand.u32 %s41, 1
        %s215 = smul.addr %s214, 4096
        %s216 = scalar_lea.vmem [#allocation2], %s215
        // Predicated region
        $region33: #{tpu_custom_call.1} parent=31 // pred_check
          %p217 = pneg %p54
        $region34: #{tpu_custom_call.1} parent=31 // pred_check_branch
          %219 = sbr.rel (%p217) target = $region36
        $region35: #{tpu_custom_call.1} parent=31 // pred_region
          %221 = dma.done %s213, 65536
        $region36: #{tpu_custom_call.1} parent=31 // pred_fallthru
          _
        // Predicated region
        $region37: #{tpu_custom_call.1} parent=31 // pred_check
          %p222 = pneg %p80
        $region38: #{tpu_custom_call.1} parent=31 // pred_check_branch
          %224 = sbr.rel (%p222) target = $region40
        $region39: #{tpu_custom_call.1} parent=31 // pred_region
          %226 = dma.done [#allocation6], 16384
        $region40: #{tpu_custom_call.1} parent=31 // pred_fallthru
          _
        // Predicated region
        $region41: #{tpu_custom_call.1} parent=31 // pred_check
          %p227 = pneg %p106
        $region42: #{tpu_custom_call.1} parent=31 // pred_check_branch
          %229 = sbr.rel (%p227) target = $region44
        $region43: #{tpu_custom_call.1} parent=31 // pred_region
          %231 = dma.done [#allocation6], 16
        $region44: #{tpu_custom_call.1} parent=31 // pred_fallthru
          _
        %s232 = sand.u32 %s41, 1
        %s233 = scalar_lea.sflag [#allocation3], %s232
        %s234 = sand.u32 %s41, 1
        %s235 = smul.addr %s234, 4096
        %s236 = scalar_lea.vmem [#allocation2], %s235
        %p237 = pneg %p54
        %p238 = pneg %p51
        %p239 = pneg %p80
        %p240 = pneg %p77
        %p241 = pneg %p106
        %p242 = pneg %p103
        %p243 = pneg %p134
        %p244 = pneg %p131
        %s245 = sand.u32 %s121, 1
        %s246 = scalar_lea.sflag [#allocation4], %s245
        %s247 = sand.u32 %s121, 1
        %s248 = smul.addr %s247, 512
        %s249 = scalar_lea.vmem [#allocation8], %s248
        %s250 = smul.u32 64, %s25
        %s251 = smul.u32 64, %s25
        %v252 = vld [vmem:[%s216] sm:$0xff]
        %v253 = vld [vmem:[%s216 + $0x8] sm:$0xff]
        %v254 = vld [vmem:[%s216 + $0x10] sm:$0xff]
        %v255 = vld [vmem:[%s216 + $0x18] sm:$0xff]
        %v256 = vld [vmem:[%s216 + $0x20] sm:$0xff]
        %v257 = vld [vmem:[%s216 + $0x28] sm:$0xff]
        %v258 = vld [vmem:[%s216 + $0x30] sm:$0xff]
        %v259 = vld [vmem:[%s216 + $0x38] sm:$0xff]
        %v260 = vld [vmem:[%s216 + $0x40] sm:$0xff]
        %v261 = vld [vmem:[%s216 + $0x48] sm:$0xff]
        %v262 = vld [vmem:[%s216 + $0x50] sm:$0xff]
        %v263 = vld [vmem:[%s216 + $0x58] sm:$0xff]
        %v264 = vld [vmem:[%s216 + $0x60] sm:$0xff]
        %v265 = vld [vmem:[%s216 + $0x68] sm:$0xff]
        %v266 = vld [vmem:[%s216 + $0x70] sm:$0xff]
        %v267 = vld [vmem:[%s216 + $0x78] sm:$0xff]
        %v268 = vld [vmem:[%s216 + $0x80] sm:$0xff]
        %v269 = vld [vmem:[%s216 + $0x88] sm:$0xff]
        %v270 = vld [vmem:[%s216 + $0x90] sm:$0xff]
        %v271 = vld [vmem:[%s216 + $0x98] sm:$0xff]
        %v272 = vld [vmem:[%s216 + $0xa0] sm:$0xff]
        %v273 = vld [vmem:[%s216 + $0xa8] sm:$0xff]
        %v274 = vld [vmem:[%s216 + $0xb0] sm:$0xff]
        %v275 = vld [vmem:[%s216 + $0xb8] sm:$0xff]
        %v276 = vld [vmem:[%s216 + $0xc0] sm:$0xff]
        %v277 = vld [vmem:[%s216 + $0xc8] sm:$0xff]
        %v278 = vld [vmem:[%s216 + $0xd0] sm:$0xff]
        %v279 = vld [vmem:[%s216 + $0xd8] sm:$0xff]
        %v280 = vld [vmem:[%s216 + $0xe0] sm:$0xff]
        %v281 = vld [vmem:[%s216 + $0xe8] sm:$0xff]
        %v282 = vld [vmem:[%s216 + $0xf0] sm:$0xff]
        %v283 = vld [vmem:[%s216 + $0xf8] sm:$0xff]
        %v284 = vld [vmem:[%s216 + $0x100] sm:$0xff]
        %v285 = vld [vmem:[%s216 + $0x108] sm:$0xff]
        %v286 = vld [vmem:[%s216 + $0x110] sm:$0xff]
        %v287 = vld [vmem:[%s216 + $0x118] sm:$0xff]
        %v288 = vld [vmem:[%s216 + $0x120] sm:$0xff]
        %v289 = vld [vmem:[%s216 + $0x128] sm:$0xff]
        %v290 = vld [vmem:[%s216 + $0x130] sm:$0xff]
        %v291 = vld [vmem:[%s216 + $0x138] sm:$0xff]
        %v292 = vld [vmem:[%s216 + $0x140] sm:$0xff]
        %v293 = vld [vmem:[%s216 + $0x148] sm:$0xff]
        %v294 = vld [vmem:[%s216 + $0x150] sm:$0xff]
        %v295 = vld [vmem:[%s216 + $0x158] sm:$0xff]
        %v296 = vld [vmem:[%s216 + $0x160] sm:$0xff]
        %v297 = vld [vmem:[%s216 + $0x168] sm:$0xff]
        %v298 = vld [vmem:[%s216 + $0x170] sm:$0xff]
        %v299 = vld [vmem:[%s216 + $0x178] sm:$0xff]
        %v300 = vld [vmem:[%s216 + $0x180] sm:$0xff]
        %v301 = vld [vmem:[%s216 + $0x188] sm:$0xff]
        %v302 = vld [vmem:[%s216 + $0x190] sm:$0xff]
        %v303 = vld [vmem:[%s216 + $0x198] sm:$0xff]
        %v304 = vld [vmem:[%s216 + $0x1a0] sm:$0xff]
        %v305 = vld [vmem:[%s216 + $0x1a8] sm:$0xff]
        %v306 = vld [vmem:[%s216 + $0x1b0] sm:$0xff]
        %v307 = vld [vmem:[%s216 + $0x1b8] sm:$0xff]
        %v308 = vld [vmem:[%s216 + $0x1c0] sm:$0xff]
        %v309 = vld [vmem:[%s216 + $0x1c8] sm:$0xff]
        %v310 = vld [vmem:[%s216 + $0x1d0] sm:$0xff]
        %v311 = vld [vmem:[%s216 + $0x1d8] sm:$0xff]
        %v312 = vld [vmem:[%s216 + $0x1e0] sm:$0xff]
        %v313 = vld [vmem:[%s216 + $0x1e8] sm:$0xff]
        %v314 = vld [vmem:[%s216 + $0x1f0] sm:$0xff]
        %v315 = vld [vmem:[%s216 + $0x1f8] sm:$0xff]
        %v316 = vld [vmem:[%s216 + $0x200] sm:$0xff]
        %v317 = vld [vmem:[%s216 + $0x208] sm:$0xff]
        %v318 = vld [vmem:[%s216 + $0x210] sm:$0xff]
        %v319 = vld [vmem:[%s216 + $0x218] sm:$0xff]
        %v320 = vld [vmem:[%s216 + $0x220] sm:$0xff]
        %v321 = vld [vmem:[%s216 + $0x228] sm:$0xff]
        %v322 = vld [vmem:[%s216 + $0x230] sm:$0xff]
        %v323 = vld [vmem:[%s216 + $0x238] sm:$0xff]
        %v324 = vld [vmem:[%s216 + $0x240] sm:$0xff]
        %v325 = vld [vmem:[%s216 + $0x248] sm:$0xff]
        %v326 = vld [vmem:[%s216 + $0x250] sm:$0xff]
        %v327 = vld [vmem:[%s216 + $0x258] sm:$0xff]
        %v328 = vld [vmem:[%s216 + $0x260] sm:$0xff]
        %v329 = vld [vmem:[%s216 + $0x268] sm:$0xff]
        %v330 = vld [vmem:[%s216 + $0x270] sm:$0xff]
        %v331 = vld [vmem:[%s216 + $0x278] sm:$0xff]
        %v332 = vld [vmem:[%s216 + $0x280] sm:$0xff]
        %v333 = vld [vmem:[%s216 + $0x288] sm:$0xff]
        %v334 = vld [vmem:[%s216 + $0x290] sm:$0xff]
        %v335 = vld [vmem:[%s216 + $0x298] sm:$0xff]
        %v336 = vld [vmem:[%s216 + $0x2a0] sm:$0xff]
        %v337 = vld [vmem:[%s216 + $0x2a8] sm:$0xff]
        %v338 = vld [vmem:[%s216 + $0x2b0] sm:$0xff]
        %v339 = vld [vmem:[%s216 + $0x2b8] sm:$0xff]
        %v340 = vld [vmem:[%s216 + $0x2c0] sm:$0xff]
        %v341 = vld [vmem:[%s216 + $0x2c8] sm:$0xff]
        %v342 = vld [vmem:[%s216 + $0x2d0] sm:$0xff]
        %v343 = vld [vmem:[%s216 + $0x2d8] sm:$0xff]
        %v344 = vld [vmem:[%s216 + $0x2e0] sm:$0xff]
        %v345 = vld [vmem:[%s216 + $0x2e8] sm:$0xff]
        %v346 = vld [vmem:[%s216 + $0x2f0] sm:$0xff]
        %v347 = vld [vmem:[%s216 + $0x2f8] sm:$0xff]
        %v348 = vld [vmem:[%s216 + $0x300] sm:$0xff]
        %v349 = vld [vmem:[%s216 + $0x308] sm:$0xff]
        %v350 = vld [vmem:[%s216 + $0x310] sm:$0xff]
        %v351 = vld [vmem:[%s216 + $0x318] sm:$0xff]
        %v352 = vld [vmem:[%s216 + $0x320] sm:$0xff]
        %v353 = vld [vmem:[%s216 + $0x328] sm:$0xff]
        %v354 = vld [vmem:[%s216 + $0x330] sm:$0xff]
        %v355 = vld [vmem:[%s216 + $0x338] sm:$0xff]
        %v356 = vld [vmem:[%s216 + $0x340] sm:$0xff]
        %v357 = vld [vmem:[%s216 + $0x348] sm:$0xff]
        %v358 = vld [vmem:[%s216 + $0x350] sm:$0xff]
        %v359 = vld [vmem:[%s216 + $0x358] sm:$0xff]
        %v360 = vld [vmem:[%s216 + $0x360] sm:$0xff]
        %v361 = vld [vmem:[%s216 + $0x368] sm:$0xff]
        %v362 = vld [vmem:[%s216 + $0x370] sm:$0xff]
        %v363 = vld [vmem:[%s216 + $0x378] sm:$0xff]
        %v364 = vld [vmem:[%s216 + $0x380] sm:$0xff]
        %v365 = vld [vmem:[%s216 + $0x388] sm:$0xff]
        %v366 = vld [vmem:[%s216 + $0x390] sm:$0xff]
        %v367 = vld [vmem:[%s216 + $0x398] sm:$0xff]
        %v368 = vld [vmem:[%s216 + $0x3a0] sm:$0xff]
        %v369 = vld [vmem:[%s216 + $0x3a8] sm:$0xff]
        %v370 = vld [vmem:[%s216 + $0x3b0] sm:$0xff]
        %v371 = vld [vmem:[%s216 + $0x3b8] sm:$0xff]
        %v372 = vld [vmem:[%s216 + $0x3c0] sm:$0xff]
        %v373 = vld [vmem:[%s216 + $0x3c8] sm:$0xff]
        %v374 = vld [vmem:[%s216 + $0x3d0] sm:$0xff]
        %v375 = vld [vmem:[%s216 + $0x3d8] sm:$0xff]
        %v376 = vld [vmem:[%s216 + $0x3e0] sm:$0xff]
        %v377 = vld [vmem:[%s216 + $0x3e8] sm:$0xff]
        %v378 = vld [vmem:[%s216 + $0x3f0] sm:$0xff]
        %v379 = vld [vmem:[%s216 + $0x3f8] sm:$0xff]
        %v380 = vld [vmem:[%s216 + $0x400] sm:$0xff]
        %v381 = vld [vmem:[%s216 + $0x408] sm:$0xff]
        %v382 = vld [vmem:[%s216 + $0x410] sm:$0xff]
        %v383 = vld [vmem:[%s216 + $0x418] sm:$0xff]
        %v384 = vld [vmem:[%s216 + $0x420] sm:$0xff]
        %v385 = vld [vmem:[%s216 + $0x428] sm:$0xff]
        %v386 = vld [vmem:[%s216 + $0x430] sm:$0xff]
        %v387 = vld [vmem:[%s216 + $0x438] sm:$0xff]
        %v388 = vld [vmem:[%s216 + $0x440] sm:$0xff]
        %v389 = vld [vmem:[%s216 + $0x448] sm:$0xff]
        %v390 = vld [vmem:[%s216 + $0x450] sm:$0xff]
        %v391 = vld [vmem:[%s216 + $0x458] sm:$0xff]
        %v392 = vld [vmem:[%s216 + $0x460] sm:$0xff]
        %v393 = vld [vmem:[%s216 + $0x468] sm:$0xff]
        %v394 = vld [vmem:[%s216 + $0x470] sm:$0xff]
        %v395 = vld [vmem:[%s216 + $0x478] sm:$0xff]
        %v396 = vld [vmem:[%s216 + $0x480] sm:$0xff]
        %v397 = vld [vmem:[%s216 + $0x488] sm:$0xff]
        %v398 = vld [vmem:[%s216 + $0x490] sm:$0xff]
        %v399 = vld [vmem:[%s216 + $0x498] sm:$0xff]
        %v400 = vld [vmem:[%s216 + $0x4a0] sm:$0xff]
        %v401 = vld [vmem:[%s216 + $0x4a8] sm:$0xff]
        %v402 = vld [vmem:[%s216 + $0x4b0] sm:$0xff]
        %v403 = vld [vmem:[%s216 + $0x4b8] sm:$0xff]
        %v404 = vld [vmem:[%s216 + $0x4c0] sm:$0xff]
        %v405 = vld [vmem:[%s216 + $0x4c8] sm:$0xff]
        %v406 = vld [vmem:[%s216 + $0x4d0] sm:$0xff]
        %v407 = vld [vmem:[%s216 + $0x4d8] sm:$0xff]
        %v408 = vld [vmem:[%s216 + $0x4e0] sm:$0xff]
        %v409 = vld [vmem:[%s216 + $0x4e8] sm:$0xff]
        %v410 = vld [vmem:[%s216 + $0x4f0] sm:$0xff]
        %v411 = vld [vmem:[%s216 + $0x4f8] sm:$0xff]
        %v412 = vld [vmem:[%s216 + $0x500] sm:$0xff]
        %v413 = vld [vmem:[%s216 + $0x508] sm:$0xff]
        %v414 = vld [vmem:[%s216 + $0x510] sm:$0xff]
        %v415 = vld [vmem:[%s216 + $0x518] sm:$0xff]
        %v416 = vld [vmem:[%s216 + $0x520] sm:$0xff]
        %v417 = vld [vmem:[%s216 + $0x528] sm:$0xff]
        %v418 = vld [vmem:[%s216 + $0x530] sm:$0xff]
        %v419 = vld [vmem:[%s216 + $0x538] sm:$0xff]
        %v420 = vld [vmem:[%s216 + $0x540] sm:$0xff]
        %v421 = vld [vmem:[%s216 + $0x548] sm:$0xff]
        %v422 = vld [vmem:[%s216 + $0x550] sm:$0xff]
        %v423 = vld [vmem:[%s216 + $0x558] sm:$0xff]
        %v424 = vld [vmem:[%s216 + $0x560] sm:$0xff]
        %v425 = vld [vmem:[%s216 + $0x568] sm:$0xff]
        %v426 = vld [vmem:[%s216 + $0x570] sm:$0xff]
        %v427 = vld [vmem:[%s216 + $0x578] sm:$0xff]
        %v428 = vld [vmem:[%s216 + $0x580] sm:$0xff]
        %v429 = vld [vmem:[%s216 + $0x588] sm:$0xff]
        %v430 = vld [vmem:[%s216 + $0x590] sm:$0xff]
        %v431 = vld [vmem:[%s216 + $0x598] sm:$0xff]
        %v432 = vld [vmem:[%s216 + $0x5a0] sm:$0xff]
        %v433 = vld [vmem:[%s216 + $0x5a8] sm:$0xff]
        %v434 = vld [vmem:[%s216 + $0x5b0] sm:$0xff]
        %v435 = vld [vmem:[%s216 + $0x5b8] sm:$0xff]
        %v436 = vld [vmem:[%s216 + $0x5c0] sm:$0xff]
        %v437 = vld [vmem:[%s216 + $0x5c8] sm:$0xff]
        %v438 = vld [vmem:[%s216 + $0x5d0] sm:$0xff]
        %v439 = vld [vmem:[%s216 + $0x5d8] sm:$0xff]
        %v440 = vld [vmem:[%s216 + $0x5e0] sm:$0xff]
        %v441 = vld [vmem:[%s216 + $0x5e8] sm:$0xff]
        %v442 = vld [vmem:[%s216 + $0x5f0] sm:$0xff]
        %v443 = vld [vmem:[%s216 + $0x5f8] sm:$0xff]
        %v444 = vld [vmem:[%s216 + $0x600] sm:$0xff]
        %v445 = vld [vmem:[%s216 + $0x608] sm:$0xff]
        %v446 = vld [vmem:[%s216 + $0x610] sm:$0xff]
        %v447 = vld [vmem:[%s216 + $0x618] sm:$0xff]
        %v448 = vld [vmem:[%s216 + $0x620] sm:$0xff]
        %v449 = vld [vmem:[%s216 + $0x628] sm:$0xff]
        %v450 = vld [vmem:[%s216 + $0x630] sm:$0xff]
        %v451 = vld [vmem:[%s216 + $0x638] sm:$0xff]
        %v452 = vld [vmem:[%s216 + $0x640] sm:$0xff]
        %v453 = vld [vmem:[%s216 + $0x648] sm:$0xff]
        %v454 = vld [vmem:[%s216 + $0x650] sm:$0xff]
        %v455 = vld [vmem:[%s216 + $0x658] sm:$0xff]
        %v456 = vld [vmem:[%s216 + $0x660] sm:$0xff]
        %v457 = vld [vmem:[%s216 + $0x668] sm:$0xff]
        %v458 = vld [vmem:[%s216 + $0x670] sm:$0xff]
        %v459 = vld [vmem:[%s216 + $0x678] sm:$0xff]
        %v460 = vld [vmem:[%s216 + $0x680] sm:$0xff]
        %v461 = vld [vmem:[%s216 + $0x688] sm:$0xff]
        %v462 = vld [vmem:[%s216 + $0x690] sm:$0xff]
        %v463 = vld [vmem:[%s216 + $0x698] sm:$0xff]
        %v464 = vld [vmem:[%s216 + $0x6a0] sm:$0xff]
        %v465 = vld [vmem:[%s216 + $0x6a8] sm:$0xff]
        %v466 = vld [vmem:[%s216 + $0x6b0] sm:$0xff]
        %v467 = vld [vmem:[%s216 + $0x6b8] sm:$0xff]
        %v468 = vld [vmem:[%s216 + $0x6c0] sm:$0xff]
        %v469 = vld [vmem:[%s216 + $0x6c8] sm:$0xff]
        %v470 = vld [vmem:[%s216 + $0x6d0] sm:$0xff]
        %v471 = vld [vmem:[%s216 + $0x6d8] sm:$0xff]
        %v472 = vld [vmem:[%s216 + $0x6e0] sm:$0xff]
        %v473 = vld [vmem:[%s216 + $0x6e8] sm:$0xff]
        %v474 = vld [vmem:[%s216 + $0x6f0] sm:$0xff]
        %v475 = vld [vmem:[%s216 + $0x6f8] sm:$0xff]
        %v476 = vld [vmem:[%s216 + $0x700] sm:$0xff]
        %v477 = vld [vmem:[%s216 + $0x708] sm:$0xff]
        %v478 = vld [vmem:[%s216 + $0x710] sm:$0xff]
        %v479 = vld [vmem:[%s216 + $0x718] sm:$0xff]
        %v480 = vld [vmem:[%s216 + $0x720] sm:$0xff]
        %v481 = vld [vmem:[%s216 + $0x728] sm:$0xff]
        %v482 = vld [vmem:[%s216 + $0x730] sm:$0xff]
        %v483 = vld [vmem:[%s216 + $0x738] sm:$0xff]
        %v484 = vld [vmem:[%s216 + $0x740] sm:$0xff]
        %v485 = vld [vmem:[%s216 + $0x748] sm:$0xff]
        %v486 = vld [vmem:[%s216 + $0x750] sm:$0xff]
        %v487 = vld [vmem:[%s216 + $0x758] sm:$0xff]
        %v488 = vld [vmem:[%s216 + $0x760] sm:$0xff]
        %v489 = vld [vmem:[%s216 + $0x768] sm:$0xff]
        %v490 = vld [vmem:[%s216 + $0x770] sm:$0xff]
        %v491 = vld [vmem:[%s216 + $0x778] sm:$0xff]
        %v492 = vld [vmem:[%s216 + $0x780] sm:$0xff]
        %v493 = vld [vmem:[%s216 + $0x788] sm:$0xff]
        %v494 = vld [vmem:[%s216 + $0x790] sm:$0xff]
        %v495 = vld [vmem:[%s216 + $0x798] sm:$0xff]
        %v496 = vld [vmem:[%s216 + $0x7a0] sm:$0xff]
        %v497 = vld [vmem:[%s216 + $0x7a8] sm:$0xff]
        %v498 = vld [vmem:[%s216 + $0x7b0] sm:$0xff]
        %v499 = vld [vmem:[%s216 + $0x7b8] sm:$0xff]
        %v500 = vld [vmem:[%s216 + $0x7c0] sm:$0xff]
        %v501 = vld [vmem:[%s216 + $0x7c8] sm:$0xff]
        %v502 = vld [vmem:[%s216 + $0x7d0] sm:$0xff]
        %v503 = vld [vmem:[%s216 + $0x7d8] sm:$0xff]
        %v504 = vld [vmem:[%s216 + $0x7e0] sm:$0xff]
        %v505 = vld [vmem:[%s216 + $0x7e8] sm:$0xff]
        %v506 = vld [vmem:[%s216 + $0x7f0] sm:$0xff]
        %v507 = vld [vmem:[%s216 + $0x7f8] sm:$0xff]
        %v508 = vld [vmem:[%s216 + $0x800] sm:$0xff]
        %v509 = vld [vmem:[%s216 + $0x808] sm:$0xff]
        %v510 = vld [vmem:[%s216 + $0x810] sm:$0xff]
        %v511 = vld [vmem:[%s216 + $0x818] sm:$0xff]
        %v512 = vld [vmem:[%s216 + $0x820] sm:$0xff]
        %v513 = vld [vmem:[%s216 + $0x828] sm:$0xff]
        %v514 = vld [vmem:[%s216 + $0x830] sm:$0xff]
        %v515 = vld [vmem:[%s216 + $0x838] sm:$0xff]
        %v516 = vld [vmem:[%s216 + $0x840] sm:$0xff]
        %v517 = vld [vmem:[%s216 + $0x848] sm:$0xff]
        %v518 = vld [vmem:[%s216 + $0x850] sm:$0xff]
        %v519 = vld [vmem:[%s216 + $0x858] sm:$0xff]
        %v520 = vld [vmem:[%s216 + $0x860] sm:$0xff]
        %v521 = vld [vmem:[%s216 + $0x868] sm:$0xff]
        %v522 = vld [vmem:[%s216 + $0x870] sm:$0xff]
        %v523 = vld [vmem:[%s216 + $0x878] sm:$0xff]
        %v524 = vld [vmem:[%s216 + $0x880] sm:$0xff]
        %v525 = vld [vmem:[%s216 + $0x888] sm:$0xff]
        %v526 = vld [vmem:[%s216 + $0x890] sm:$0xff]
        %v527 = vld [vmem:[%s216 + $0x898] sm:$0xff]
        %v528 = vld [vmem:[%s216 + $0x8a0] sm:$0xff]
        %v529 = vld [vmem:[%s216 + $0x8a8] sm:$0xff]
        %v530 = vld [vmem:[%s216 + $0x8b0] sm:$0xff]
        %v531 = vld [vmem:[%s216 + $0x8b8] sm:$0xff]
        %v532 = vld [vmem:[%s216 + $0x8c0] sm:$0xff]
        %v533 = vld [vmem:[%s216 + $0x8c8] sm:$0xff]
        %v534 = vld [vmem:[%s216 + $0x8d0] sm:$0xff]
        %v535 = vld [vmem:[%s216 + $0x8d8] sm:$0xff]
        %v536 = vld [vmem:[%s216 + $0x8e0] sm:$0xff]
        %v537 = vld [vmem:[%s216 + $0x8e8] sm:$0xff]
        %v538 = vld [vmem:[%s216 + $0x8f0] sm:$0xff]
        %v539 = vld [vmem:[%s216 + $0x8f8] sm:$0xff]
        %v540 = vld [vmem:[%s216 + $0x900] sm:$0xff]
        %v541 = vld [vmem:[%s216 + $0x908] sm:$0xff]
        %v542 = vld [vmem:[%s216 + $0x910] sm:$0xff]
        %v543 = vld [vmem:[%s216 + $0x918] sm:$0xff]
        %v544 = vld [vmem:[%s216 + $0x920] sm:$0xff]
        %v545 = vld [vmem:[%s216 + $0x928] sm:$0xff]
        %v546 = vld [vmem:[%s216 + $0x930] sm:$0xff]
        %v547 = vld [vmem:[%s216 + $0x938] sm:$0xff]
        %v548 = vld [vmem:[%s216 + $0x940] sm:$0xff]
        %v549 = vld [vmem:[%s216 + $0x948] sm:$0xff]
        %v550 = vld [vmem:[%s216 + $0x950] sm:$0xff]
        %v551 = vld [vmem:[%s216 + $0x958] sm:$0xff]
        %v552 = vld [vmem:[%s216 + $0x960] sm:$0xff]
        %v553 = vld [vmem:[%s216 + $0x968] sm:$0xff]
        %v554 = vld [vmem:[%s216 + $0x970] sm:$0xff]
        %v555 = vld [vmem:[%s216 + $0x978] sm:$0xff]
        %v556 = vld [vmem:[%s216 + $0x980] sm:$0xff]
        %v557 = vld [vmem:[%s216 + $0x988] sm:$0xff]
        %v558 = vld [vmem:[%s216 + $0x990] sm:$0xff]
        %v559 = vld [vmem:[%s216 + $0x998] sm:$0xff]
        %v560 = vld [vmem:[%s216 + $0x9a0] sm:$0xff]
        %v561 = vld [vmem:[%s216 + $0x9a8] sm:$0xff]
        %v562 = vld [vmem:[%s216 + $0x9b0] sm:$0xff]
        %v563 = vld [vmem:[%s216 + $0x9b8] sm:$0xff]
        %v564 = vld [vmem:[%s216 + $0x9c0] sm:$0xff]
        %v565 = vld [vmem:[%s216 + $0x9c8] sm:$0xff]
        %v566 = vld [vmem:[%s216 + $0x9d0] sm:$0xff]
        %v567 = vld [vmem:[%s216 + $0x9d8] sm:$0xff]
        %v568 = vld [vmem:[%s216 + $0x9e0] sm:$0xff]
        %v569 = vld [vmem:[%s216 + $0x9e8] sm:$0xff]
        %v570 = vld [vmem:[%s216 + $0x9f0] sm:$0xff]
        %v571 = vld [vmem:[%s216 + $0x9f8] sm:$0xff]
        %v572 = vld [vmem:[%s216 + $0xa00] sm:$0xff]
        %v573 = vld [vmem:[%s216 + $0xa08] sm:$0xff]
        %v574 = vld [vmem:[%s216 + $0xa10] sm:$0xff]
        %v575 = vld [vmem:[%s216 + $0xa18] sm:$0xff]
        %v576 = vld [vmem:[%s216 + $0xa20] sm:$0xff]
        %v577 = vld [vmem:[%s216 + $0xa28] sm:$0xff]
        %v578 = vld [vmem:[%s216 + $0xa30] sm:$0xff]
        %v579 = vld [vmem:[%s216 + $0xa38] sm:$0xff]
        %v580 = vld [vmem:[%s216 + $0xa40] sm:$0xff]
        %v581 = vld [vmem:[%s216 + $0xa48] sm:$0xff]
        %v582 = vld [vmem:[%s216 + $0xa50] sm:$0xff]
        %v583 = vld [vmem:[%s216 + $0xa58] sm:$0xff]
        %v584 = vld [vmem:[%s216 + $0xa60] sm:$0xff]
        %v585 = vld [vmem:[%s216 + $0xa68] sm:$0xff]
        %v586 = vld [vmem:[%s216 + $0xa70] sm:$0xff]
        %v587 = vld [vmem:[%s216 + $0xa78] sm:$0xff]
        %v588 = vld [vmem:[%s216 + $0xa80] sm:$0xff]
        %v589 = vld [vmem:[%s216 + $0xa88] sm:$0xff]
        %v590 = vld [vmem:[%s216 + $0xa90] sm:$0xff]
        %v591 = vld [vmem:[%s216 + $0xa98] sm:$0xff]
        %v592 = vld [vmem:[%s216 + $0xaa0] sm:$0xff]
        %v593 = vld [vmem:[%s216 + $0xaa8] sm:$0xff]
        %v594 = vld [vmem:[%s216 + $0xab0] sm:$0xff]
        %v595 = vld [vmem:[%s216 + $0xab8] sm:$0xff]
        %v596 = vld [vmem:[%s216 + $0xac0] sm:$0xff]
        %v597 = vld [vmem:[%s216 + $0xac8] sm:$0xff]
        %v598 = vld [vmem:[%s216 + $0xad0] sm:$0xff]
        %v599 = vld [vmem:[%s216 + $0xad8] sm:$0xff]
        %v600 = vld [vmem:[%s216 + $0xae0] sm:$0xff]
        %v601 = vld [vmem:[%s216 + $0xae8] sm:$0xff]
        %v602 = vld [vmem:[%s216 + $0xaf0] sm:$0xff]
        %v603 = vld [vmem:[%s216 + $0xaf8] sm:$0xff]
        %v604 = vld [vmem:[%s216 + $0xb00] sm:$0xff]
        %v605 = vld [vmem:[%s216 + $0xb08] sm:$0xff]
        %v606 = vld [vmem:[%s216 + $0xb10] sm:$0xff]
        %v607 = vld [vmem:[%s216 + $0xb18] sm:$0xff]
        %v608 = vld [vmem:[%s216 + $0xb20] sm:$0xff]
        %v609 = vld [vmem:[%s216 + $0xb28] sm:$0xff]
        %v610 = vld [vmem:[%s216 + $0xb30] sm:$0xff]
        %v611 = vld [vmem:[%s216 + $0xb38] sm:$0xff]
        %v612 = vld [vmem:[%s216 + $0xb40] sm:$0xff]
        %v613 = vld [vmem:[%s216 + $0xb48] sm:$0xff]
        %v614 = vld [vmem:[%s216 + $0xb50] sm:$0xff]
        %v615 = vld [vmem:[%s216 + $0xb58] sm:$0xff]
        %v616 = vld [vmem:[%s216 + $0xb60] sm:$0xff]
        %v617 = vld [vmem:[%s216 + $0xb68] sm:$0xff]
        %v618 = vld [vmem:[%s216 + $0xb70] sm:$0xff]
        %v619 = vld [vmem:[%s216 + $0xb78] sm:$0xff]
        %v620 = vld [vmem:[%s216 + $0xb80] sm:$0xff]
        %v621 = vld [vmem:[%s216 + $0xb88] sm:$0xff]
        %v622 = vld [vmem:[%s216 + $0xb90] sm:$0xff]
        %v623 = vld [vmem:[%s216 + $0xb98] sm:$0xff]
        %v624 = vld [vmem:[%s216 + $0xba0] sm:$0xff]
        %v625 = vld [vmem:[%s216 + $0xba8] sm:$0xff]
        %v626 = vld [vmem:[%s216 + $0xbb0] sm:$0xff]
        %v627 = vld [vmem:[%s216 + $0xbb8] sm:$0xff]
        %v628 = vld [vmem:[%s216 + $0xbc0] sm:$0xff]
        %v629 = vld [vmem:[%s216 + $0xbc8] sm:$0xff]
        %v630 = vld [vmem:[%s216 + $0xbd0] sm:$0xff]
        %v631 = vld [vmem:[%s216 + $0xbd8] sm:$0xff]
        %v632 = vld [vmem:[%s216 + $0xbe0] sm:$0xff]
        %v633 = vld [vmem:[%s216 + $0xbe8] sm:$0xff]
        %v634 = vld [vmem:[%s216 + $0xbf0] sm:$0xff]
        %v635 = vld [vmem:[%s216 + $0xbf8] sm:$0xff]
        %v636 = vld [vmem:[%s216 + $0xc00] sm:$0xff]
        %v637 = vld [vmem:[%s216 + $0xc08] sm:$0xff]
        %v638 = vld [vmem:[%s216 + $0xc10] sm:$0xff]
        %v639 = vld [vmem:[%s216 + $0xc18] sm:$0xff]
        %v640 = vld [vmem:[%s216 + $0xc20] sm:$0xff]
        %v641 = vld [vmem:[%s216 + $0xc28] sm:$0xff]
        %v642 = vld [vmem:[%s216 + $0xc30] sm:$0xff]
        %v643 = vld [vmem:[%s216 + $0xc38] sm:$0xff]
        %v644 = vld [vmem:[%s216 + $0xc40] sm:$0xff]
        %v645 = vld [vmem:[%s216 + $0xc48] sm:$0xff]
        %v646 = vld [vmem:[%s216 + $0xc50] sm:$0xff]
        %v647 = vld [vmem:[%s216 + $0xc58] sm:$0xff]
        %v648 = vld [vmem:[%s216 + $0xc60] sm:$0xff]
        %v649 = vld [vmem:[%s216 + $0xc68] sm:$0xff]
        %v650 = vld [vmem:[%s216 + $0xc70] sm:$0xff]
        %v651 = vld [vmem:[%s216 + $0xc78] sm:$0xff]
        %v652 = vld [vmem:[%s216 + $0xc80] sm:$0xff]
        %v653 = vld [vmem:[%s216 + $0xc88] sm:$0xff]
        %v654 = vld [vmem:[%s216 + $0xc90] sm:$0xff]
        %v655 = vld [vmem:[%s216 + $0xc98] sm:$0xff]
        %v656 = vld [vmem:[%s216 + $0xca0] sm:$0xff]
        %v657 = vld [vmem:[%s216 + $0xca8] sm:$0xff]
        %v658 = vld [vmem:[%s216 + $0xcb0] sm:$0xff]
        %v659 = vld [vmem:[%s216 + $0xcb8] sm:$0xff]
        %v660 = vld [vmem:[%s216 + $0xcc0] sm:$0xff]
        %v661 = vld [vmem:[%s216 + $0xcc8] sm:$0xff]
        %v662 = vld [vmem:[%s216 + $0xcd0] sm:$0xff]
        %v663 = vld [vmem:[%s216 + $0xcd8] sm:$0xff]
        %v664 = vld [vmem:[%s216 + $0xce0] sm:$0xff]
        %v665 = vld [vmem:[%s216 + $0xce8] sm:$0xff]
        %v666 = vld [vmem:[%s216 + $0xcf0] sm:$0xff]
        %v667 = vld [vmem:[%s216 + $0xcf8] sm:$0xff]
        %v668 = vld [vmem:[%s216 + $0xd00] sm:$0xff]
        %v669 = vld [vmem:[%s216 + $0xd08] sm:$0xff]
        %v670 = vld [vmem:[%s216 + $0xd10] sm:$0xff]
        %v671 = vld [vmem:[%s216 + $0xd18] sm:$0xff]
        %v672 = vld [vmem:[%s216 + $0xd20] sm:$0xff]
        %v673 = vld [vmem:[%s216 + $0xd28] sm:$0xff]
        %v674 = vld [vmem:[%s216 + $0xd30] sm:$0xff]
        %v675 = vld [vmem:[%s216 + $0xd38] sm:$0xff]
        %v676 = vld [vmem:[%s216 + $0xd40] sm:$0xff]
        %v677 = vld [vmem:[%s216 + $0xd48] sm:$0xff]
        %v678 = vld [vmem:[%s216 + $0xd50] sm:$0xff]
        %v679 = vld [vmem:[%s216 + $0xd58] sm:$0xff]
        %v680 = vld [vmem:[%s216 + $0xd60] sm:$0xff]
        %v681 = vld [vmem:[%s216 + $0xd68] sm:$0xff]
        %v682 = vld [vmem:[%s216 + $0xd70] sm:$0xff]
        %v683 = vld [vmem:[%s216 + $0xd78] sm:$0xff]
        %v684 = vld [vmem:[%s216 + $0xd80] sm:$0xff]
        %v685 = vld [vmem:[%s216 + $0xd88] sm:$0xff]
        %v686 = vld [vmem:[%s216 + $0xd90] sm:$0xff]
        %v687 = vld [vmem:[%s216 + $0xd98] sm:$0xff]
        %v688 = vld [vmem:[%s216 + $0xda0] sm:$0xff]
        %v689 = vld [vmem:[%s216 + $0xda8] sm:$0xff]
        %v690 = vld [vmem:[%s216 + $0xdb0] sm:$0xff]
        %v691 = vld [vmem:[%s216 + $0xdb8] sm:$0xff]
        %v692 = vld [vmem:[%s216 + $0xdc0] sm:$0xff]
        %v693 = vld [vmem:[%s216 + $0xdc8] sm:$0xff]
        %v694 = vld [vmem:[%s216 + $0xdd0] sm:$0xff]
        %v695 = vld [vmem:[%s216 + $0xdd8] sm:$0xff]
        %v696 = vld [vmem:[%s216 + $0xde0] sm:$0xff]
        %v697 = vld [vmem:[%s216 + $0xde8] sm:$0xff]
        %v698 = vld [vmem:[%s216 + $0xdf0] sm:$0xff]
        %v699 = vld [vmem:[%s216 + $0xdf8] sm:$0xff]
        %v700 = vld [vmem:[%s216 + $0xe00] sm:$0xff]
        %v701 = vld [vmem:[%s216 + $0xe08] sm:$0xff]
        %v702 = vld [vmem:[%s216 + $0xe10] sm:$0xff]
        %v703 = vld [vmem:[%s216 + $0xe18] sm:$0xff]
        %v704 = vld [vmem:[%s216 + $0xe20] sm:$0xff]
        %v705 = vld [vmem:[%s216 + $0xe28] sm:$0xff]
        %v706 = vld [vmem:[%s216 + $0xe30] sm:$0xff]
        %v707 = vld [vmem:[%s216 + $0xe38] sm:$0xff]
        %v708 = vld [vmem:[%s216 + $0xe40] sm:$0xff]
        %v709 = vld [vmem:[%s216 + $0xe48] sm:$0xff]
        %v710 = vld [vmem:[%s216 + $0xe50] sm:$0xff]
        %v711 = vld [vmem:[%s216 + $0xe58] sm:$0xff]
        %v712 = vld [vmem:[%s216 + $0xe60] sm:$0xff]
        %v713 = vld [vmem:[%s216 + $0xe68] sm:$0xff]
        %v714 = vld [vmem:[%s216 + $0xe70] sm:$0xff]
        %v715 = vld [vmem:[%s216 + $0xe78] sm:$0xff]
        %v716 = vld [vmem:[%s216 + $0xe80] sm:$0xff]
        %v717 = vld [vmem:[%s216 + $0xe88] sm:$0xff]
        %v718 = vld [vmem:[%s216 + $0xe90] sm:$0xff]
        %v719 = vld [vmem:[%s216 + $0xe98] sm:$0xff]
        %v720 = vld [vmem:[%s216 + $0xea0] sm:$0xff]
        %v721 = vld [vmem:[%s216 + $0xea8] sm:$0xff]
        %v722 = vld [vmem:[%s216 + $0xeb0] sm:$0xff]
        %v723 = vld [vmem:[%s216 + $0xeb8] sm:$0xff]
        %v724 = vld [vmem:[%s216 + $0xec0] sm:$0xff]
        %v725 = vld [vmem:[%s216 + $0xec8] sm:$0xff]
        %v726 = vld [vmem:[%s216 + $0xed0] sm:$0xff]
        %v727 = vld [vmem:[%s216 + $0xed8] sm:$0xff]
        %v728 = vld [vmem:[%s216 + $0xee0] sm:$0xff]
        %v729 = vld [vmem:[%s216 + $0xee8] sm:$0xff]
        %v730 = vld [vmem:[%s216 + $0xef0] sm:$0xff]
        %v731 = vld [vmem:[%s216 + $0xef8] sm:$0xff]
        %v732 = vld [vmem:[%s216 + $0xf00] sm:$0xff]
        %v733 = vld [vmem:[%s216 + $0xf08] sm:$0xff]
        %v734 = vld [vmem:[%s216 + $0xf10] sm:$0xff]
        %v735 = vld [vmem:[%s216 + $0xf18] sm:$0xff]
        %v736 = vld [vmem:[%s216 + $0xf20] sm:$0xff]
        %v737 = vld [vmem:[%s216 + $0xf28] sm:$0xff]
        %v738 = vld [vmem:[%s216 + $0xf30] sm:$0xff]
        %v739 = vld [vmem:[%s216 + $0xf38] sm:$0xff]
        %v740 = vld [vmem:[%s216 + $0xf40] sm:$0xff]
        %v741 = vld [vmem:[%s216 + $0xf48] sm:$0xff]
        %v742 = vld [vmem:[%s216 + $0xf50] sm:$0xff]
        %v743 = vld [vmem:[%s216 + $0xf58] sm:$0xff]
        %v744 = vld [vmem:[%s216 + $0xf60] sm:$0xff]
        %v745 = vld [vmem:[%s216 + $0xf68] sm:$0xff]
        %v746 = vld [vmem:[%s216 + $0xf70] sm:$0xff]
        %v747 = vld [vmem:[%s216 + $0xf78] sm:$0xff]
        %v748 = vld [vmem:[%s216 + $0xf80] sm:$0xff]
        %v749 = vld [vmem:[%s216 + $0xf88] sm:$0xff]
        %v750 = vld [vmem:[%s216 + $0xf90] sm:$0xff]
        %v751 = vld [vmem:[%s216 + $0xf98] sm:$0xff]
        %v752 = vld [vmem:[%s216 + $0xfa0] sm:$0xff]
        %v753 = vld [vmem:[%s216 + $0xfa8] sm:$0xff]
        %v754 = vld [vmem:[%s216 + $0xfb0] sm:$0xff]
        %v755 = vld [vmem:[%s216 + $0xfb8] sm:$0xff]
        %v756 = vld [vmem:[%s216 + $0xfc0] sm:$0xff]
        %v757 = vld [vmem:[%s216 + $0xfc8] sm:$0xff]
        %v758 = vld [vmem:[%s216 + $0xfd0] sm:$0xff]
        %v759 = vld [vmem:[%s216 + $0xfd8] sm:$0xff]
        %v760 = vld [vmem:[%s216 + $0xfe0] sm:$0xff]
        %v761 = vld [vmem:[%s216 + $0xfe8] sm:$0xff]
        %v762 = vld [vmem:[%s216 + $0xff0] sm:$0xff]
        %v763 = vld [vmem:[%s216 + $0xff8] sm:$0xff]
        %v764 = vld [vmem:[#allocation5] sm:$0xff]
        %v765 = vld [vmem:[#allocation5 + $0x8] sm:$0xff]
        %v766 = vld [vmem:[#allocation5 + $0x10] sm:$0xff]
        %v767 = vld [vmem:[#allocation5 + $0x18] sm:$0xff]
        %v768 = vld [vmem:[#allocation5 + $0x20] sm:$0xff]
        %v769 = vld [vmem:[#allocation5 + $0x28] sm:$0xff]
        %v770 = vld [vmem:[#allocation5 + $0x30] sm:$0xff]
        %v771 = vld [vmem:[#allocation5 + $0x38] sm:$0xff]
        %v772 = vld [vmem:[#allocation5 + $0x40] sm:$0xff]
        %v773 = vld [vmem:[#allocation5 + $0x48] sm:$0xff]
        %v774 = vld [vmem:[#allocation5 + $0x50] sm:$0xff]
        %v775 = vld [vmem:[#allocation5 + $0x58] sm:$0xff]
        %v776 = vld [vmem:[#allocation5 + $0x60] sm:$0xff]
        %v777 = vld [vmem:[#allocation5 + $0x68] sm:$0xff]
        %v778 = vld [vmem:[#allocation5 + $0x70] sm:$0xff]
        %v779 = vld [vmem:[#allocation5 + $0x78] sm:$0xff]
        %v780 = vld [vmem:[#allocation5 + $0x80] sm:$0xff]
        %v781 = vld [vmem:[#allocation5 + $0x88] sm:$0xff]
        %v782 = vld [vmem:[#allocation5 + $0x90] sm:$0xff]
        %v783 = vld [vmem:[#allocation5 + $0x98] sm:$0xff]
        %v784 = vld [vmem:[#allocation5 + $0xa0] sm:$0xff]
        %v785 = vld [vmem:[#allocation5 + $0xa8] sm:$0xff]
        %v786 = vld [vmem:[#allocation5 + $0xb0] sm:$0xff]
        %v787 = vld [vmem:[#allocation5 + $0xb8] sm:$0xff]
        %v788 = vld [vmem:[#allocation5 + $0xc0] sm:$0xff]
        %v789 = vld [vmem:[#allocation5 + $0xc8] sm:$0xff]
        %v790 = vld [vmem:[#allocation5 + $0xd0] sm:$0xff]
        %v791 = vld [vmem:[#allocation5 + $0xd8] sm:$0xff]
        %v792 = vld [vmem:[#allocation5 + $0xe0] sm:$0xff]
        %v793 = vld [vmem:[#allocation5 + $0xe8] sm:$0xff]
        %v794 = vld [vmem:[#allocation5 + $0xf0] sm:$0xff]
        %v795 = vld [vmem:[#allocation5 + $0xf8] sm:$0xff]
        %v796 = vld [vmem:[#allocation5 + $0x100] sm:$0xff]
        %v797 = vld [vmem:[#allocation5 + $0x108] sm:$0xff]
        %v798 = vld [vmem:[#allocation5 + $0x110] sm:$0xff]
        %v799 = vld [vmem:[#allocation5 + $0x118] sm:$0xff]
        %v800 = vld [vmem:[#allocation5 + $0x120] sm:$0xff]
        %v801 = vld [vmem:[#allocation5 + $0x128] sm:$0xff]
        %v802 = vld [vmem:[#allocation5 + $0x130] sm:$0xff]
        %v803 = vld [vmem:[#allocation5 + $0x138] sm:$0xff]
        %v804 = vld [vmem:[#allocation5 + $0x140] sm:$0xff]
        %v805 = vld [vmem:[#allocation5 + $0x148] sm:$0xff]
        %v806 = vld [vmem:[#allocation5 + $0x150] sm:$0xff]
        %v807 = vld [vmem:[#allocation5 + $0x158] sm:$0xff]
        %v808 = vld [vmem:[#allocation5 + $0x160] sm:$0xff]
        %v809 = vld [vmem:[#allocation5 + $0x168] sm:$0xff]
        %v810 = vld [vmem:[#allocation5 + $0x170] sm:$0xff]
        %v811 = vld [vmem:[#allocation5 + $0x178] sm:$0xff]
        %v812 = vld [vmem:[#allocation5 + $0x180] sm:$0xff]
        %v813 = vld [vmem:[#allocation5 + $0x188] sm:$0xff]
        %v814 = vld [vmem:[#allocation5 + $0x190] sm:$0xff]
        %v815 = vld [vmem:[#allocation5 + $0x198] sm:$0xff]
        %v816 = vld [vmem:[#allocation5 + $0x1a0] sm:$0xff]
        %v817 = vld [vmem:[#allocation5 + $0x1a8] sm:$0xff]
        %v818 = vld [vmem:[#allocation5 + $0x1b0] sm:$0xff]
        %v819 = vld [vmem:[#allocation5 + $0x1b8] sm:$0xff]
        %v820 = vld [vmem:[#allocation5 + $0x1c0] sm:$0xff]
        %v821 = vld [vmem:[#allocation5 + $0x1c8] sm:$0xff]
        %v822 = vld [vmem:[#allocation5 + $0x1d0] sm:$0xff]
        %v823 = vld [vmem:[#allocation5 + $0x1d8] sm:$0xff]
        %v824 = vld [vmem:[#allocation5 + $0x1e0] sm:$0xff]
        %v825 = vld [vmem:[#allocation5 + $0x1e8] sm:$0xff]
        %v826 = vld [vmem:[#allocation5 + $0x1f0] sm:$0xff]
        %v827 = vld [vmem:[#allocation5 + $0x1f8] sm:$0xff]
        %v828 = vld [vmem:[#allocation5 + $0x200] sm:$0xff]
        %v829 = vld [vmem:[#allocation5 + $0x208] sm:$0xff]
        %v830 = vld [vmem:[#allocation5 + $0x210] sm:$0xff]
        %v831 = vld [vmem:[#allocation5 + $0x218] sm:$0xff]
        %v832 = vld [vmem:[#allocation5 + $0x220] sm:$0xff]
        %v833 = vld [vmem:[#allocation5 + $0x228] sm:$0xff]
        %v834 = vld [vmem:[#allocation5 + $0x230] sm:$0xff]
        %v835 = vld [vmem:[#allocation5 + $0x238] sm:$0xff]
        %v836 = vld [vmem:[#allocation5 + $0x240] sm:$0xff]
        %v837 = vld [vmem:[#allocation5 + $0x248] sm:$0xff]
        %v838 = vld [vmem:[#allocation5 + $0x250] sm:$0xff]
        %v839 = vld [vmem:[#allocation5 + $0x258] sm:$0xff]
        %v840 = vld [vmem:[#allocation5 + $0x260] sm:$0xff]
        %v841 = vld [vmem:[#allocation5 + $0x268] sm:$0xff]
        %v842 = vld [vmem:[#allocation5 + $0x270] sm:$0xff]
        %v843 = vld [vmem:[#allocation5 + $0x278] sm:$0xff]
        %v844 = vld [vmem:[#allocation5 + $0x280] sm:$0xff]
        %v845 = vld [vmem:[#allocation5 + $0x288] sm:$0xff]
        %v846 = vld [vmem:[#allocation5 + $0x290] sm:$0xff]
        %v847 = vld [vmem:[#allocation5 + $0x298] sm:$0xff]
        %v848 = vld [vmem:[#allocation5 + $0x2a0] sm:$0xff]
        %v849 = vld [vmem:[#allocation5 + $0x2a8] sm:$0xff]
        %v850 = vld [vmem:[#allocation5 + $0x2b0] sm:$0xff]
        %v851 = vld [vmem:[#allocation5 + $0x2b8] sm:$0xff]
        %v852 = vld [vmem:[#allocation5 + $0x2c0] sm:$0xff]
        %v853 = vld [vmem:[#allocation5 + $0x2c8] sm:$0xff]
        %v854 = vld [vmem:[#allocation5 + $0x2d0] sm:$0xff]
        %v855 = vld [vmem:[#allocation5 + $0x2d8] sm:$0xff]
        %v856 = vld [vmem:[#allocation5 + $0x2e0] sm:$0xff]
        %v857 = vld [vmem:[#allocation5 + $0x2e8] sm:$0xff]
        %v858 = vld [vmem:[#allocation5 + $0x2f0] sm:$0xff]
        %v859 = vld [vmem:[#allocation5 + $0x2f8] sm:$0xff]
        %v860 = vld [vmem:[#allocation5 + $0x300] sm:$0xff]
        %v861 = vld [vmem:[#allocation5 + $0x308] sm:$0xff]
        %v862 = vld [vmem:[#allocation5 + $0x310] sm:$0xff]
        %v863 = vld [vmem:[#allocation5 + $0x318] sm:$0xff]
        %v864 = vld [vmem:[#allocation5 + $0x320] sm:$0xff]
        %v865 = vld [vmem:[#allocation5 + $0x328] sm:$0xff]
        %v866 = vld [vmem:[#allocation5 + $0x330] sm:$0xff]
        %v867 = vld [vmem:[#allocation5 + $0x338] sm:$0xff]
        %v868 = vld [vmem:[#allocation5 + $0x340] sm:$0xff]
        %v869 = vld [vmem:[#allocation5 + $0x348] sm:$0xff]
        %v870 = vld [vmem:[#allocation5 + $0x350] sm:$0xff]
        %v871 = vld [vmem:[#allocation5 + $0x358] sm:$0xff]
        %v872 = vld [vmem:[#allocation5 + $0x360] sm:$0xff]
        %v873 = vld [vmem:[#allocation5 + $0x368] sm:$0xff]
        %v874 = vld [vmem:[#allocation5 + $0x370] sm:$0xff]
        %v875 = vld [vmem:[#allocation5 + $0x378] sm:$0xff]
        %v876 = vld [vmem:[#allocation5 + $0x380] sm:$0xff]
        %v877 = vld [vmem:[#allocation5 + $0x388] sm:$0xff]
        %v878 = vld [vmem:[#allocation5 + $0x390] sm:$0xff]
        %v879 = vld [vmem:[#allocation5 + $0x398] sm:$0xff]
        %v880 = vld [vmem:[#allocation5 + $0x3a0] sm:$0xff]
        %v881 = vld [vmem:[#allocation5 + $0x3a8] sm:$0xff]
        %v882 = vld [vmem:[#allocation5 + $0x3b0] sm:$0xff]
        %v883 = vld [vmem:[#allocation5 + $0x3b8] sm:$0xff]
        %v884 = vld [vmem:[#allocation5 + $0x3c0] sm:$0xff]
        %v885 = vld [vmem:[#allocation5 + $0x3c8] sm:$0xff]
        %v886 = vld [vmem:[#allocation5 + $0x3d0] sm:$0xff]
        %v887 = vld [vmem:[#allocation5 + $0x3d8] sm:$0xff]
        %v888 = vld [vmem:[#allocation5 + $0x3e0] sm:$0xff]
        %v889 = vld [vmem:[#allocation5 + $0x3e8] sm:$0xff]
        %v890 = vld [vmem:[#allocation5 + $0x3f0] sm:$0xff]
        %v891 = vld [vmem:[#allocation5 + $0x3f8] sm:$0xff]
        %v892 = vld [vmem:[#allocation7] sm:$0x1]
        %v894 = vperm.slane %v892, 0
        %896 = vmatpush.msra.mxu0 %v779
        %897 = vmatpush.msra.mxu0 %v778
        %898 = vmatpush.msra.mxu0 %v777
        %899 = vmatpush.msra.mxu0 %v776
        %900 = vmatpush.msra.mxu0 %v775
        %901 = vmatpush.msra.mxu0 %v774
        %902 = vmatpush.msra.mxu0 %v773
        %903 = vmatpush.msra.mxu0 %v772
        %904 = vmatpush.msra.mxu0 %v771
        %905 = vmatpush.msra.mxu0 %v770
        %906 = vmatpush.msra.mxu0 %v769
        %907 = vmatpush.msra.mxu0 %v768
        %908 = vmatpush.msra.mxu0 %v767
        %909 = vmatpush.msra.mxu0 %v766
        %910 = vmatpush.msra.mxu0 %v765
        %911 = vmatpush.msra.mxu0 %v764
        %912 = vmatmul.f32.gmra.mxu0 %v252
        %v913 = vpop.f32.mrf.mxu0
        %v914 = vadd.f32 %v894, %v913
        %915 = vmatmul.f32.gmra.mxu0 %v260
        %v916 = vpop.f32.mrf.mxu0
        %v917 = vadd.f32 %v894, %v916
        %918 = vmatmul.f32.gmra.mxu0 %v268
        %v919 = vpop.f32.mrf.mxu0
        %v920 = vadd.f32 %v894, %v919
        %921 = vmatmul.f32.gmra.mxu0 %v276
        %v922 = vpop.f32.mrf.mxu0
        %v923 = vadd.f32 %v894, %v922
        %924 = vmatmul.f32.gmra.mxu0 %v284
        %v925 = vpop.f32.mrf.mxu0
        %v926 = vadd.f32 %v894, %v925
        %927 = vmatmul.f32.gmra.mxu0 %v292
        %v928 = vpop.f32.mrf.mxu0
        %v929 = vadd.f32 %v894, %v928
        %930 = vmatmul.f32.gmra.mxu0 %v300
        %v931 = vpop.f32.mrf.mxu0
        %v932 = vadd.f32 %v894, %v931
        %933 = vmatmul.f32.gmra.mxu0 %v308
        %v934 = vpop.f32.mrf.mxu0
        %v935 = vadd.f32 %v894, %v934
        %936 = vmatmul.f32.gmra.mxu0 %v316
        %v937 = vpop.f32.mrf.mxu0
        %v938 = vadd.f32 %v894, %v937
        %939 = vmatmul.f32.gmra.mxu0 %v324
        %v940 = vpop.f32.mrf.mxu0
        %v941 = vadd.f32 %v894, %v940
        %942 = vmatmul.f32.gmra.mxu0 %v332
        %v943 = vpop.f32.mrf.mxu0
        %v944 = vadd.f32 %v894, %v943
        %945 = vmatmul.f32.gmra.mxu0 %v340
        %v946 = vpop.f32.mrf.mxu0
        %v947 = vadd.f32 %v894, %v946
        %948 = vmatmul.f32.gmra.mxu0 %v348
        %v949 = vpop.f32.mrf.mxu0
        %v950 = vadd.f32 %v894, %v949
        %951 = vmatmul.f32.gmra.mxu0 %v356
        %v952 = vpop.f32.mrf.mxu0
        %v953 = vadd.f32 %v894, %v952
        %954 = vmatmul.f32.gmra.mxu0 %v364
        %v955 = vpop.f32.mrf.mxu0
        %v956 = vadd.f32 %v894, %v955
        %957 = vmatmul.f32.gmra.mxu0 %v372
        %v958 = vpop.f32.mrf.mxu0
        %v959 = vadd.f32 %v894, %v958
        %960 = vmatmul.f32.gmra.mxu0 %v380
        %v961 = vpop.f32.mrf.mxu0
        %v962 = vadd.f32 %v894, %v961
        %963 = vmatmul.f32.gmra.mxu0 %v388
        %v964 = vpop.f32.mrf.mxu0
        %v965 = vadd.f32 %v894, %v964
        %966 = vmatmul.f32.gmra.mxu0 %v396
        %v967 = vpop.f32.mrf.mxu0
        %v968 = vadd.f32 %v894, %v967
        %969 = vmatmul.f32.gmra.mxu0 %v404
        %v970 = vpop.f32.mrf.mxu0
        %v971 = vadd.f32 %v894, %v970
        %972 = vmatmul.f32.gmra.mxu0 %v412
        %v973 = vpop.f32.mrf.mxu0
        %v974 = vadd.f32 %v894, %v973
        %975 = vmatmul.f32.gmra.mxu0 %v420
        %v976 = vpop.f32.mrf.mxu0
        %v977 = vadd.f32 %v894, %v976
        %978 = vmatmul.f32.gmra.mxu0 %v428
        %v979 = vpop.f32.mrf.mxu0
        %v980 = vadd.f32 %v894, %v979
        %981 = vmatmul.f32.gmra.mxu0 %v436
        %v982 = vpop.f32.mrf.mxu0
        %v983 = vadd.f32 %v894, %v982
        %984 = vmatmul.f32.gmra.mxu0 %v444
        %v985 = vpop.f32.mrf.mxu0
        %v986 = vadd.f32 %v894, %v985
        %987 = vmatmul.f32.gmra.mxu0 %v452
        %v988 = vpop.f32.mrf.mxu0
        %v989 = vadd.f32 %v894, %v988
        %990 = vmatmul.f32.gmra.mxu0 %v460
        %v991 = vpop.f32.mrf.mxu0
        %v992 = vadd.f32 %v894, %v991
        %993 = vmatmul.f32.gmra.mxu0 %v468
        %v994 = vpop.f32.mrf.mxu0
        %v995 = vadd.f32 %v894, %v994
        %996 = vmatmul.f32.gmra.mxu0 %v476
        %v997 = vpop.f32.mrf.mxu0
        %v998 = vadd.f32 %v894, %v997
        %999 = vmatmul.f32.gmra.mxu0 %v484
        %v1000 = vpop.f32.mrf.mxu0
        %v1001 = vadd.f32 %v894, %v1000
        %1002 = vmatmul.f32.gmra.mxu0 %v492
        %v1003 = vpop.f32.mrf.mxu0
        %v1004 = vadd.f32 %v894, %v1003
        %1005 = vmatmul.f32.gmra.mxu0 %v500
        %v1006 = vpop.f32.mrf.mxu0
        %v1007 = vadd.f32 %v894, %v1006
        %1008 = vmatmul.f32.gmra.mxu0 %v508
        %v1009 = vpop.f32.mrf.mxu0
        %v1010 = vadd.f32 %v894, %v1009
        %1011 = vmatmul.f32.gmra.mxu0 %v516
        %v1012 = vpop.f32.mrf.mxu0
        %v1013 = vadd.f32 %v894, %v1012
        %1014 = vmatmul.f32.gmra.mxu0 %v524
        %v1015 = vpop.f32.mrf.mxu0
        %v1016 = vadd.f32 %v894, %v1015
        %1017 = vmatmul.f32.gmra.mxu0 %v532
        %v1018 = vpop.f32.mrf.mxu0
        %v1019 = vadd.f32 %v894, %v1018
        %1020 = vmatmul.f32.gmra.mxu0 %v540
        %v1021 = vpop.f32.mrf.mxu0
        %v1022 = vadd.f32 %v894, %v1021
        %1023 = vmatmul.f32.gmra.mxu0 %v548
        %v1024 = vpop.f32.mrf.mxu0
        %v1025 = vadd.f32 %v894, %v1024
        %1026 = vmatmul.f32.gmra.mxu0 %v556
        %v1027 = vpop.f32.mrf.mxu0
        %v1028 = vadd.f32 %v894, %v1027
        %1029 = vmatmul.f32.gmra.mxu0 %v564
        %v1030 = vpop.f32.mrf.mxu0
        %v1031 = vadd.f32 %v894, %v1030
        %1032 = vmatmul.f32.gmra.mxu0 %v572
        %v1033 = vpop.f32.mrf.mxu0
        %v1034 = vadd.f32 %v894, %v1033
        %1035 = vmatmul.f32.gmra.mxu0 %v580
        %v1036 = vpop.f32.mrf.mxu0
        %v1037 = vadd.f32 %v894, %v1036
        %1038 = vmatmul.f32.gmra.mxu0 %v588
        %v1039 = vpop.f32.mrf.mxu0
        %v1040 = vadd.f32 %v894, %v1039
        %1041 = vmatmul.f32.gmra.mxu0 %v596
        %v1042 = vpop.f32.mrf.mxu0
        %v1043 = vadd.f32 %v894, %v1042
        %1044 = vmatmul.f32.gmra.mxu0 %v604
        %v1045 = vpop.f32.mrf.mxu0
        %v1046 = vadd.f32 %v894, %v1045
        %1047 = vmatmul.f32.gmra.mxu0 %v612
        %v1048 = vpop.f32.mrf.mxu0
        %v1049 = vadd.f32 %v894, %v1048
        %1050 = vmatmul.f32.gmra.mxu0 %v620
        %v1051 = vpop.f32.mrf.mxu0
        %v1052 = vadd.f32 %v894, %v1051
        %1053 = vmatmul.f32.gmra.mxu0 %v628
        %v1054 = vpop.f32.mrf.mxu0
        %v1055 = vadd.f32 %v894, %v1054
        %1056 = vmatmul.f32.gmra.mxu0 %v636
        %v1057 = vpop.f32.mrf.mxu0
        %v1058 = vadd.f32 %v894, %v1057
        %1059 = vmatmul.f32.gmra.mxu0 %v644
        %v1060 = vpop.f32.mrf.mxu0
        %v1061 = vadd.f32 %v894, %v1060
        %1062 = vmatmul.f32.gmra.mxu0 %v652
        %v1063 = vpop.f32.mrf.mxu0
        %v1064 = vadd.f32 %v894, %v1063
        %1065 = vmatmul.f32.gmra.mxu0 %v660
        %v1066 = vpop.f32.mrf.mxu0
        %v1067 = vadd.f32 %v894, %v1066
        %1068 = vmatmul.f32.gmra.mxu0 %v668
        %v1069 = vpop.f32.mrf.mxu0
        %v1070 = vadd.f32 %v894, %v1069
        %1071 = vmatmul.f32.gmra.mxu0 %v676
        %v1072 = vpop.f32.mrf.mxu0
        %v1073 = vadd.f32 %v894, %v1072
        %1074 = vmatmul.f32.gmra.mxu0 %v684
        %v1075 = vpop.f32.mrf.mxu0
        %v1076 = vadd.f32 %v894, %v1075
        %1077 = vmatmul.f32.gmra.mxu0 %v692
        %v1078 = vpop.f32.mrf.mxu0
        %v1079 = vadd.f32 %v894, %v1078
        %1080 = vmatmul.f32.gmra.mxu0 %v700
        %v1081 = vpop.f32.mrf.mxu0
        %v1082 = vadd.f32 %v894, %v1081
        %1083 = vmatmul.f32.gmra.mxu0 %v708
        %v1084 = vpop.f32.mrf.mxu0
        %v1085 = vadd.f32 %v894, %v1084
        %1086 = vmatmul.f32.gmra.mxu0 %v716
        %v1087 = vpop.f32.mrf.mxu0
        %v1088 = vadd.f32 %v894, %v1087
        %1089 = vmatmul.f32.gmra.mxu0 %v724
        %v1090 = vpop.f32.mrf.mxu0
        %v1091 = vadd.f32 %v894, %v1090
        %1092 = vmatmul.f32.gmra.mxu0 %v732
        %v1093 = vpop.f32.mrf.mxu0
        %v1094 = vadd.f32 %v894, %v1093
        %1095 = vmatmul.f32.gmra.mxu0 %v740
        %v1096 = vpop.f32.mrf.mxu0
        %v1097 = vadd.f32 %v894, %v1096
        %1098 = vmatmul.f32.gmra.mxu0 %v748
        %v1099 = vpop.f32.mrf.mxu0
        %v1100 = vadd.f32 %v894, %v1099
        %1101 = vmatmul.f32.gmra.mxu0 %v756
        %v1102 = vpop.f32.mrf.mxu0
        %v1103 = vadd.f32 %v894, %v1102
        %1104 = vdwg.mxu0
        %1105 = vmatpush.msra.mxu0 %v795
        %1106 = vmatpush.msra.mxu0 %v794
        %1107 = vmatpush.msra.mxu0 %v793
        %1108 = vmatpush.msra.mxu0 %v792
        %1109 = vmatpush.msra.mxu0 %v791
        %1110 = vmatpush.msra.mxu0 %v790
        %1111 = vmatpush.msra.mxu0 %v789
        %1112 = vmatpush.msra.mxu0 %v788
        %1113 = vmatpush.msra.mxu0 %v787
        %1114 = vmatpush.msra.mxu0 %v786
        %1115 = vmatpush.msra.mxu0 %v785
        %1116 = vmatpush.msra.mxu0 %v784
        %1117 = vmatpush.msra.mxu0 %v783
        %1118 = vmatpush.msra.mxu0 %v782
        %1119 = vmatpush.msra.mxu0 %v781
        %1120 = vmatpush.msra.mxu0 %v780
        %1121 = vmatmul.f32.gmra.mxu0 %v253
        %v1122 = vpop.f32.mrf.mxu0
        %v1123 = vadd.f32 %v914, %v1122
        %1124 = vmatmul.f32.gmra.mxu0 %v261
        %v1125 = vpop.f32.mrf.mxu0
        %v1126 = vadd.f32 %v917, %v1125
        %1127 = vmatmul.f32.gmra.mxu0 %v269
        %v1128 = vpop.f32.mrf.mxu0
        %v1129 = vadd.f32 %v920, %v1128
        %1130 = vmatmul.f32.gmra.mxu0 %v277
        %v1131 = vpop.f32.mrf.mxu0
        %v1132 = vadd.f32 %v923, %v1131
        %1133 = vmatmul.f32.gmra.mxu0 %v285
        %v1134 = vpop.f32.mrf.mxu0
        %v1135 = vadd.f32 %v926, %v1134
        %1136 = vmatmul.f32.gmra.mxu0 %v293
        %v1137 = vpop.f32.mrf.mxu0
        %v1138 = vadd.f32 %v929, %v1137
        %1139 = vmatmul.f32.gmra.mxu0 %v301
        %v1140 = vpop.f32.mrf.mxu0
        %v1141 = vadd.f32 %v932, %v1140
        %1142 = vmatmul.f32.gmra.mxu0 %v309
        %v1143 = vpop.f32.mrf.mxu0
        %v1144 = vadd.f32 %v935, %v1143
        %1145 = vmatmul.f32.gmra.mxu0 %v317
        %v1146 = vpop.f32.mrf.mxu0
        %v1147 = vadd.f32 %v938, %v1146
        %1148 = vmatmul.f32.gmra.mxu0 %v325
        %v1149 = vpop.f32.mrf.mxu0
        %v1150 = vadd.f32 %v941, %v1149
        %1151 = vmatmul.f32.gmra.mxu0 %v333
        %v1152 = vpop.f32.mrf.mxu0
        %v1153 = vadd.f32 %v944, %v1152
        %1154 = vmatmul.f32.gmra.mxu0 %v341
        %v1155 = vpop.f32.mrf.mxu0
        %v1156 = vadd.f32 %v947, %v1155
        %1157 = vmatmul.f32.gmra.mxu0 %v349
        %v1158 = vpop.f32.mrf.mxu0
        %v1159 = vadd.f32 %v950, %v1158
        %1160 = vmatmul.f32.gmra.mxu0 %v357
        %v1161 = vpop.f32.mrf.mxu0
        %v1162 = vadd.f32 %v953, %v1161
        %1163 = vmatmul.f32.gmra.mxu0 %v365
        %v1164 = vpop.f32.mrf.mxu0
        %v1165 = vadd.f32 %v956, %v1164
        %1166 = vmatmul.f32.gmra.mxu0 %v373
        %v1167 = vpop.f32.mrf.mxu0
        %v1168 = vadd.f32 %v959, %v1167
        %1169 = vmatmul.f32.gmra.mxu0 %v381
        %v1170 = vpop.f32.mrf.mxu0
        %v1171 = vadd.f32 %v962, %v1170
        %1172 = vmatmul.f32.gmra.mxu0 %v389
        %v1173 = vpop.f32.mrf.mxu0
        %v1174 = vadd.f32 %v965, %v1173
        %1175 = vmatmul.f32.gmra.mxu0 %v397
        %v1176 = vpop.f32.mrf.mxu0
        %v1177 = vadd.f32 %v968, %v1176
        %1178 = vmatmul.f32.gmra.mxu0 %v405
        %v1179 = vpop.f32.mrf.mxu0
        %v1180 = vadd.f32 %v971, %v1179
        %1181 = vmatmul.f32.gmra.mxu0 %v413
        %v1182 = vpop.f32.mrf.mxu0
        %v1183 = vadd.f32 %v974, %v1182
        %1184 = vmatmul.f32.gmra.mxu0 %v421
        %v1185 = vpop.f32.mrf.mxu0
        %v1186 = vadd.f32 %v977, %v1185
        %1187 = vmatmul.f32.gmra.mxu0 %v429
        %v1188 = vpop.f32.mrf.mxu0
        %v1189 = vadd.f32 %v980, %v1188
        %1190 = vmatmul.f32.gmra.mxu0 %v437
        %v1191 = vpop.f32.mrf.mxu0
        %v1192 = vadd.f32 %v983, %v1191
        %1193 = vmatmul.f32.gmra.mxu0 %v445
        %v1194 = vpop.f32.mrf.mxu0
        %v1195 = vadd.f32 %v986, %v1194
        %1196 = vmatmul.f32.gmra.mxu0 %v453
        %v1197 = vpop.f32.mrf.mxu0
        %v1198 = vadd.f32 %v989, %v1197
        %1199 = vmatmul.f32.gmra.mxu0 %v461
        %v1200 = vpop.f32.mrf.mxu0
        %v1201 = vadd.f32 %v992, %v1200
        %1202 = vmatmul.f32.gmra.mxu0 %v469
        %v1203 = vpop.f32.mrf.mxu0
        %v1204 = vadd.f32 %v995, %v1203
        %1205 = vmatmul.f32.gmra.mxu0 %v477
        %v1206 = vpop.f32.mrf.mxu0
        %v1207 = vadd.f32 %v998, %v1206
        %1208 = vmatmul.f32.gmra.mxu0 %v485
        %v1209 = vpop.f32.mrf.mxu0
        %v1210 = vadd.f32 %v1001, %v1209
        %1211 = vmatmul.f32.gmra.mxu0 %v493
        %v1212 = vpop.f32.mrf.mxu0
        %v1213 = vadd.f32 %v1004, %v1212
        %1214 = vmatmul.f32.gmra.mxu0 %v501
        %v1215 = vpop.f32.mrf.mxu0
        %v1216 = vadd.f32 %v1007, %v1215
        %1217 = vmatmul.f32.gmra.mxu0 %v509
        %v1218 = vpop.f32.mrf.mxu0
        %v1219 = vadd.f32 %v1010, %v1218
        %1220 = vmatmul.f32.gmra.mxu0 %v517
        %v1221 = vpop.f32.mrf.mxu0
        %v1222 = vadd.f32 %v1013, %v1221
        %1223 = vmatmul.f32.gmra.mxu0 %v525
        %v1224 = vpop.f32.mrf.mxu0
        %v1225 = vadd.f32 %v1016, %v1224
        %1226 = vmatmul.f32.gmra.mxu0 %v533
        %v1227 = vpop.f32.mrf.mxu0
        %v1228 = vadd.f32 %v1019, %v1227
        %1229 = vmatmul.f32.gmra.mxu0 %v541
        %v1230 = vpop.f32.mrf.mxu0
        %v1231 = vadd.f32 %v1022, %v1230
        %1232 = vmatmul.f32.gmra.mxu0 %v549
        %v1233 = vpop.f32.mrf.mxu0
        %v1234 = vadd.f32 %v1025, %v1233
        %1235 = vmatmul.f32.gmra.mxu0 %v557
        %v1236 = vpop.f32.mrf.mxu0
        %v1237 = vadd.f32 %v1028, %v1236
        %1238 = vmatmul.f32.gmra.mxu0 %v565
        %v1239 = vpop.f32.mrf.mxu0
        %v1240 = vadd.f32 %v1031, %v1239
        %1241 = vmatmul.f32.gmra.mxu0 %v573
        %v1242 = vpop.f32.mrf.mxu0
        %v1243 = vadd.f32 %v1034, %v1242
        %1244 = vmatmul.f32.gmra.mxu0 %v581
        %v1245 = vpop.f32.mrf.mxu0
        %v1246 = vadd.f32 %v1037, %v1245
        %1247 = vmatmul.f32.gmra.mxu0 %v589
        %v1248 = vpop.f32.mrf.mxu0
        %v1249 = vadd.f32 %v1040, %v1248
        %1250 = vmatmul.f32.gmra.mxu0 %v597
        %v1251 = vpop.f32.mrf.mxu0
        %v1252 = vadd.f32 %v1043, %v1251
        %1253 = vmatmul.f32.gmra.mxu0 %v605
        %v1254 = vpop.f32.mrf.mxu0
        %v1255 = vadd.f32 %v1046, %v1254
        %1256 = vmatmul.f32.gmra.mxu0 %v613
        %v1257 = vpop.f32.mrf.mxu0
        %v1258 = vadd.f32 %v1049, %v1257
        %1259 = vmatmul.f32.gmra.mxu0 %v621
        %v1260 = vpop.f32.mrf.mxu0
        %v1261 = vadd.f32 %v1052, %v1260
        %1262 = vmatmul.f32.gmra.mxu0 %v629
        %v1263 = vpop.f32.mrf.mxu0
        %v1264 = vadd.f32 %v1055, %v1263
        %1265 = vmatmul.f32.gmra.mxu0 %v637
        %v1266 = vpop.f32.mrf.mxu0
        %v1267 = vadd.f32 %v1058, %v1266
        %1268 = vmatmul.f32.gmra.mxu0 %v645
        %v1269 = vpop.f32.mrf.mxu0
        %v1270 = vadd.f32 %v1061, %v1269
        %1271 = vmatmul.f32.gmra.mxu0 %v653
        %v1272 = vpop.f32.mrf.mxu0
        %v1273 = vadd.f32 %v1064, %v1272
        %1274 = vmatmul.f32.gmra.mxu0 %v661
        %v1275 = vpop.f32.mrf.mxu0
        %v1276 = vadd.f32 %v1067, %v1275
        %1277 = vmatmul.f32.gmra.mxu0 %v669
        %v1278 = vpop.f32.mrf.mxu0
        %v1279 = vadd.f32 %v1070, %v1278
        %1280 = vmatmul.f32.gmra.mxu0 %v677
        %v1281 = vpop.f32.mrf.mxu0
        %v1282 = vadd.f32 %v1073, %v1281
        %1283 = vmatmul.f32.gmra.mxu0 %v685
        %v1284 = vpop.f32.mrf.mxu0
        %v1285 = vadd.f32 %v1076, %v1284
        %1286 = vmatmul.f32.gmra.mxu0 %v693
        %v1287 = vpop.f32.mrf.mxu0
        %v1288 = vadd.f32 %v1079, %v1287
        %1289 = vmatmul.f32.gmra.mxu0 %v701
        %v1290 = vpop.f32.mrf.mxu0
        %v1291 = vadd.f32 %v1082, %v1290
        %1292 = vmatmul.f32.gmra.mxu0 %v709
        %v1293 = vpop.f32.mrf.mxu0
        %v1294 = vadd.f32 %v1085, %v1293
        %1295 = vmatmul.f32.gmra.mxu0 %v717
        %v1296 = vpop.f32.mrf.mxu0
        %v1297 = vadd.f32 %v1088, %v1296
        %1298 = vmatmul.f32.gmra.mxu0 %v725
        %v1299 = vpop.f32.mrf.mxu0
        %v1300 = vadd.f32 %v1091, %v1299
        %1301 = vmatmul.f32.gmra.mxu0 %v733
        %v1302 = vpop.f32.mrf.mxu0
        %v1303 = vadd.f32 %v1094, %v1302
        %1304 = vmatmul.f32.gmra.mxu0 %v741
        %v1305 = vpop.f32.mrf.mxu0
        %v1306 = vadd.f32 %v1097, %v1305
        %1307 = vmatmul.f32.gmra.mxu0 %v749
        %v1308 = vpop.f32.mrf.mxu0
        %v1309 = vadd.f32 %v1100, %v1308
        %1310 = vmatmul.f32.gmra.mxu0 %v757
        %v1311 = vpop.f32.mrf.mxu0
        %v1312 = vadd.f32 %v1103, %v1311
        %1313 = vdwg.mxu0
        %1314 = vmatpush.msra.mxu0 %v811
        %1315 = vmatpush.msra.mxu0 %v810
        %1316 = vmatpush.msra.mxu0 %v809
        %1317 = vmatpush.msra.mxu0 %v808
        %1318 = vmatpush.msra.mxu0 %v807
        %1319 = vmatpush.msra.mxu0 %v806
        %1320 = vmatpush.msra.mxu0 %v805
        %1321 = vmatpush.msra.mxu0 %v804
        %1322 = vmatpush.msra.mxu0 %v803
        %1323 = vmatpush.msra.mxu0 %v802
        %1324 = vmatpush.msra.mxu0 %v801
        %1325 = vmatpush.msra.mxu0 %v800
        %1326 = vmatpush.msra.mxu0 %v799
        %1327 = vmatpush.msra.mxu0 %v798
        %1328 = vmatpush.msra.mxu0 %v797
        %1329 = vmatpush.msra.mxu0 %v796
        %1330 = vmatmul.f32.gmra.mxu0 %v254
        %v1331 = vpop.f32.mrf.mxu0
        %v1332 = vadd.f32 %v1123, %v1331
        %1333 = vmatmul.f32.gmra.mxu0 %v262
        %v1334 = vpop.f32.mrf.mxu0
        %v1335 = vadd.f32 %v1126, %v1334
        %1336 = vmatmul.f32.gmra.mxu0 %v270
        %v1337 = vpop.f32.mrf.mxu0
        %v1338 = vadd.f32 %v1129, %v1337
        %1339 = vmatmul.f32.gmra.mxu0 %v278
        %v1340 = vpop.f32.mrf.mxu0
        %v1341 = vadd.f32 %v1132, %v1340
        %1342 = vmatmul.f32.gmra.mxu0 %v286
        %v1343 = vpop.f32.mrf.mxu0
        %v1344 = vadd.f32 %v1135, %v1343
        %1345 = vmatmul.f32.gmra.mxu0 %v294
        %v1346 = vpop.f32.mrf.mxu0
        %v1347 = vadd.f32 %v1138, %v1346
        %1348 = vmatmul.f32.gmra.mxu0 %v302
        %v1349 = vpop.f32.mrf.mxu0
        %v1350 = vadd.f32 %v1141, %v1349
        %1351 = vmatmul.f32.gmra.mxu0 %v310
        %v1352 = vpop.f32.mrf.mxu0
        %v1353 = vadd.f32 %v1144, %v1352
        %1354 = vmatmul.f32.gmra.mxu0 %v318
        %v1355 = vpop.f32.mrf.mxu0
        %v1356 = vadd.f32 %v1147, %v1355
        %1357 = vmatmul.f32.gmra.mxu0 %v326
        %v1358 = vpop.f32.mrf.mxu0
        %v1359 = vadd.f32 %v1150, %v1358
        %1360 = vmatmul.f32.gmra.mxu0 %v334
        %v1361 = vpop.f32.mrf.mxu0
        %v1362 = vadd.f32 %v1153, %v1361
        %1363 = vmatmul.f32.gmra.mxu0 %v342
        %v1364 = vpop.f32.mrf.mxu0
        %v1365 = vadd.f32 %v1156, %v1364
        %1366 = vmatmul.f32.gmra.mxu0 %v350
        %v1367 = vpop.f32.mrf.mxu0
        %v1368 = vadd.f32 %v1159, %v1367
        %1369 = vmatmul.f32.gmra.mxu0 %v358
        %v1370 = vpop.f32.mrf.mxu0
        %v1371 = vadd.f32 %v1162, %v1370
        %1372 = vmatmul.f32.gmra.mxu0 %v366
        %v1373 = vpop.f32.mrf.mxu0
        %v1374 = vadd.f32 %v1165, %v1373
        %1375 = vmatmul.f32.gmra.mxu0 %v374
        %v1376 = vpop.f32.mrf.mxu0
        %v1377 = vadd.f32 %v1168, %v1376
        %1378 = vmatmul.f32.gmra.mxu0 %v382
        %v1379 = vpop.f32.mrf.mxu0
        %v1380 = vadd.f32 %v1171, %v1379
        %1381 = vmatmul.f32.gmra.mxu0 %v390
        %v1382 = vpop.f32.mrf.mxu0
        %v1383 = vadd.f32 %v1174, %v1382
        %1384 = vmatmul.f32.gmra.mxu0 %v398
        %v1385 = vpop.f32.mrf.mxu0
        %v1386 = vadd.f32 %v1177, %v1385
        %1387 = vmatmul.f32.gmra.mxu0 %v406
        %v1388 = vpop.f32.mrf.mxu0
        %v1389 = vadd.f32 %v1180, %v1388
        %1390 = vmatmul.f32.gmra.mxu0 %v414
        %v1391 = vpop.f32.mrf.mxu0
        %v1392 = vadd.f32 %v1183, %v1391
        %1393 = vmatmul.f32.gmra.mxu0 %v422
        %v1394 = vpop.f32.mrf.mxu0
        %v1395 = vadd.f32 %v1186, %v1394
        %1396 = vmatmul.f32.gmra.mxu0 %v430
        %v1397 = vpop.f32.mrf.mxu0
        %v1398 = vadd.f32 %v1189, %v1397
        %1399 = vmatmul.f32.gmra.mxu0 %v438
        %v1400 = vpop.f32.mrf.mxu0
        %v1401 = vadd.f32 %v1192, %v1400
        %1402 = vmatmul.f32.gmra.mxu0 %v446
        %v1403 = vpop.f32.mrf.mxu0
        %v1404 = vadd.f32 %v1195, %v1403
        %1405 = vmatmul.f32.gmra.mxu0 %v454
        %v1406 = vpop.f32.mrf.mxu0
        %v1407 = vadd.f32 %v1198, %v1406
        %1408 = vmatmul.f32.gmra.mxu0 %v462
        %v1409 = vpop.f32.mrf.mxu0
        %v1410 = vadd.f32 %v1201, %v1409
        %1411 = vmatmul.f32.gmra.mxu0 %v470
        %v1412 = vpop.f32.mrf.mxu0
        %v1413 = vadd.f32 %v1204, %v1412
        %1414 = vmatmul.f32.gmra.mxu0 %v478
        %v1415 = vpop.f32.mrf.mxu0
        %v1416 = vadd.f32 %v1207, %v1415
        %1417 = vmatmul.f32.gmra.mxu0 %v486
        %v1418 = vpop.f32.mrf.mxu0
        %v1419 = vadd.f32 %v1210, %v1418
        %1420 = vmatmul.f32.gmra.mxu0 %v494
        %v1421 = vpop.f32.mrf.mxu0
        %v1422 = vadd.f32 %v1213, %v1421
        %1423 = vmatmul.f32.gmra.mxu0 %v502
        %v1424 = vpop.f32.mrf.mxu0
        %v1425 = vadd.f32 %v1216, %v1424
        %1426 = vmatmul.f32.gmra.mxu0 %v510
        %v1427 = vpop.f32.mrf.mxu0
        %v1428 = vadd.f32 %v1219, %v1427
        %1429 = vmatmul.f32.gmra.mxu0 %v518
        %v1430 = vpop.f32.mrf.mxu0
        %v1431 = vadd.f32 %v1222, %v1430
        %1432 = vmatmul.f32.gmra.mxu0 %v526
        %v1433 = vpop.f32.mrf.mxu0
        %v1434 = vadd.f32 %v1225, %v1433
        %1435 = vmatmul.f32.gmra.mxu0 %v534
        %v1436 = vpop.f32.mrf.mxu0
        %v1437 = vadd.f32 %v1228, %v1436
        %1438 = vmatmul.f32.gmra.mxu0 %v542
        %v1439 = vpop.f32.mrf.mxu0
        %v1440 = vadd.f32 %v1231, %v1439
        %1441 = vmatmul.f32.gmra.mxu0 %v550
        %v1442 = vpop.f32.mrf.mxu0
        %v1443 = vadd.f32 %v1234, %v1442
        %1444 = vmatmul.f32.gmra.mxu0 %v558
        %v1445 = vpop.f32.mrf.mxu0
        %v1446 = vadd.f32 %v1237, %v1445
        %1447 = vmatmul.f32.gmra.mxu0 %v566
        %v1448 = vpop.f32.mrf.mxu0
        %v1449 = vadd.f32 %v1240, %v1448
        %1450 = vmatmul.f32.gmra.mxu0 %v574
        %v1451 = vpop.f32.mrf.mxu0
        %v1452 = vadd.f32 %v1243, %v1451
        %1453 = vmatmul.f32.gmra.mxu0 %v582
        %v1454 = vpop.f32.mrf.mxu0
        %v1455 = vadd.f32 %v1246, %v1454
        %1456 = vmatmul.f32.gmra.mxu0 %v590
        %v1457 = vpop.f32.mrf.mxu0
        %v1458 = vadd.f32 %v1249, %v1457
        %1459 = vmatmul.f32.gmra.mxu0 %v598
        %v1460 = vpop.f32.mrf.mxu0
        %v1461 = vadd.f32 %v1252, %v1460
        %1462 = vmatmul.f32.gmra.mxu0 %v606
        %v1463 = vpop.f32.mrf.mxu0
        %v1464 = vadd.f32 %v1255, %v1463
        %1465 = vmatmul.f32.gmra.mxu0 %v614
        %v1466 = vpop.f32.mrf.mxu0
        %v1467 = vadd.f32 %v1258, %v1466
        %1468 = vmatmul.f32.gmra.mxu0 %v622
        %v1469 = vpop.f32.mrf.mxu0
        %v1470 = vadd.f32 %v1261, %v1469
        %1471 = vmatmul.f32.gmra.mxu0 %v630
        %v1472 = vpop.f32.mrf.mxu0
        %v1473 = vadd.f32 %v1264, %v1472
        %1474 = vmatmul.f32.gmra.mxu0 %v638
        %v1475 = vpop.f32.mrf.mxu0
        %v1476 = vadd.f32 %v1267, %v1475
        %1477 = vmatmul.f32.gmra.mxu0 %v646
        %v1478 = vpop.f32.mrf.mxu0
        %v1479 = vadd.f32 %v1270, %v1478
        %1480 = vmatmul.f32.gmra.mxu0 %v654
        %v1481 = vpop.f32.mrf.mxu0
        %v1482 = vadd.f32 %v1273, %v1481
        %1483 = vmatmul.f32.gmra.mxu0 %v662
        %v1484 = vpop.f32.mrf.mxu0
        %v1485 = vadd.f32 %v1276, %v1484
        %1486 = vmatmul.f32.gmra.mxu0 %v670
        %v1487 = vpop.f32.mrf.mxu0
        %v1488 = vadd.f32 %v1279, %v1487
        %1489 = vmatmul.f32.gmra.mxu0 %v678
        %v1490 = vpop.f32.mrf.mxu0
        %v1491 = vadd.f32 %v1282, %v1490
        %1492 = vmatmul.f32.gmra.mxu0 %v686
        %v1493 = vpop.f32.mrf.mxu0
        %v1494 = vadd.f32 %v1285, %v1493
        %1495 = vmatmul.f32.gmra.mxu0 %v694
        %v1496 = vpop.f32.mrf.mxu0
        %v1497 = vadd.f32 %v1288, %v1496
        %1498 = vmatmul.f32.gmra.mxu0 %v702
        %v1499 = vpop.f32.mrf.mxu0
        %v1500 = vadd.f32 %v1291, %v1499
        %1501 = vmatmul.f32.gmra.mxu0 %v710
        %v1502 = vpop.f32.mrf.mxu0
        %v1503 = vadd.f32 %v1294, %v1502
        %1504 = vmatmul.f32.gmra.mxu0 %v718
        %v1505 = vpop.f32.mrf.mxu0
        %v1506 = vadd.f32 %v1297, %v1505
        %1507 = vmatmul.f32.gmra.mxu0 %v726
        %v1508 = vpop.f32.mrf.mxu0
        %v1509 = vadd.f32 %v1300, %v1508
        %1510 = vmatmul.f32.gmra.mxu0 %v734
        %v1511 = vpop.f32.mrf.mxu0
        %v1512 = vadd.f32 %v1303, %v1511
        %1513 = vmatmul.f32.gmra.mxu0 %v742
        %v1514 = vpop.f32.mrf.mxu0
        %v1515 = vadd.f32 %v1306, %v1514
        %1516 = vmatmul.f32.gmra.mxu0 %v750
        %v1517 = vpop.f32.mrf.mxu0
        %v1518 = vadd.f32 %v1309, %v1517
        %1519 = vmatmul.f32.gmra.mxu0 %v758
        %v1520 = vpop.f32.mrf.mxu0
        %v1521 = vadd.f32 %v1312, %v1520
        %1522 = vdwg.mxu0
        %1523 = vmatpush.msra.mxu0 %v827
        %1524 = vmatpush.msra.mxu0 %v826
        %1525 = vmatpush.msra.mxu0 %v825
        %1526 = vmatpush.msra.mxu0 %v824
        %1527 = vmatpush.msra.mxu0 %v823
        %1528 = vmatpush.msra.mxu0 %v822
        %1529 = vmatpush.msra.mxu0 %v821
        %1530 = vmatpush.msra.mxu0 %v820
        %1531 = vmatpush.msra.mxu0 %v819
        %1532 = vmatpush.msra.mxu0 %v818
        %1533 = vmatpush.msra.mxu0 %v817
        %1534 = vmatpush.msra.mxu0 %v816
        %1535 = vmatpush.msra.mxu0 %v815
        %1536 = vmatpush.msra.mxu0 %v814
        %1537 = vmatpush.msra.mxu0 %v813
        %1538 = vmatpush.msra.mxu0 %v812
        %1539 = vmatmul.f32.gmra.mxu0 %v255
        %v1540 = vpop.f32.mrf.mxu0
        %v1541 = vadd.f32 %v1332, %v1540
        %1542 = vmatmul.f32.gmra.mxu0 %v263
        %v1543 = vpop.f32.mrf.mxu0
        %v1544 = vadd.f32 %v1335, %v1543
        %1545 = vmatmul.f32.gmra.mxu0 %v271
        %v1546 = vpop.f32.mrf.mxu0
        %v1547 = vadd.f32 %v1338, %v1546
        %1548 = vmatmul.f32.gmra.mxu0 %v279
        %v1549 = vpop.f32.mrf.mxu0
        %v1550 = vadd.f32 %v1341, %v1549
        %1551 = vmatmul.f32.gmra.mxu0 %v287
        %v1552 = vpop.f32.mrf.mxu0
        %v1553 = vadd.f32 %v1344, %v1552
        %1554 = vmatmul.f32.gmra.mxu0 %v295
        %v1555 = vpop.f32.mrf.mxu0
        %v1556 = vadd.f32 %v1347, %v1555
        %1557 = vmatmul.f32.gmra.mxu0 %v303
        %v1558 = vpop.f32.mrf.mxu0
        %v1559 = vadd.f32 %v1350, %v1558
        %1560 = vmatmul.f32.gmra.mxu0 %v311
        %v1561 = vpop.f32.mrf.mxu0
        %v1562 = vadd.f32 %v1353, %v1561
        %1563 = vmatmul.f32.gmra.mxu0 %v319
        %v1564 = vpop.f32.mrf.mxu0
        %v1565 = vadd.f32 %v1356, %v1564
        %1566 = vmatmul.f32.gmra.mxu0 %v327
        %v1567 = vpop.f32.mrf.mxu0
        %v1568 = vadd.f32 %v1359, %v1567
        %1569 = vmatmul.f32.gmra.mxu0 %v335
        %v1570 = vpop.f32.mrf.mxu0
        %v1571 = vadd.f32 %v1362, %v1570
        %1572 = vmatmul.f32.gmra.mxu0 %v343
        %v1573 = vpop.f32.mrf.mxu0
        %v1574 = vadd.f32 %v1365, %v1573
        %1575 = vmatmul.f32.gmra.mxu0 %v351
        %v1576 = vpop.f32.mrf.mxu0
        %v1577 = vadd.f32 %v1368, %v1576
        %1578 = vmatmul.f32.gmra.mxu0 %v359
        %v1579 = vpop.f32.mrf.mxu0
        %v1580 = vadd.f32 %v1371, %v1579
        %1581 = vmatmul.f32.gmra.mxu0 %v367
        %v1582 = vpop.f32.mrf.mxu0
        %v1583 = vadd.f32 %v1374, %v1582
        %1584 = vmatmul.f32.gmra.mxu0 %v375
        %v1585 = vpop.f32.mrf.mxu0
        %v1586 = vadd.f32 %v1377, %v1585
        %1587 = vmatmul.f32.gmra.mxu0 %v383
        %v1588 = vpop.f32.mrf.mxu0
        %v1589 = vadd.f32 %v1380, %v1588
        %1590 = vmatmul.f32.gmra.mxu0 %v391
        %v1591 = vpop.f32.mrf.mxu0
        %v1592 = vadd.f32 %v1383, %v1591
        %1593 = vmatmul.f32.gmra.mxu0 %v399
        %v1594 = vpop.f32.mrf.mxu0
        %v1595 = vadd.f32 %v1386, %v1594
        %1596 = vmatmul.f32.gmra.mxu0 %v407
        %v1597 = vpop.f32.mrf.mxu0
        %v1598 = vadd.f32 %v1389, %v1597
        %1599 = vmatmul.f32.gmra.mxu0 %v415
        %v1600 = vpop.f32.mrf.mxu0
        %v1601 = vadd.f32 %v1392, %v1600
        %1602 = vmatmul.f32.gmra.mxu0 %v423
        %v1603 = vpop.f32.mrf.mxu0
        %v1604 = vadd.f32 %v1395, %v1603
        %1605 = vmatmul.f32.gmra.mxu0 %v431
        %v1606 = vpop.f32.mrf.mxu0
        %v1607 = vadd.f32 %v1398, %v1606
        %1608 = vmatmul.f32.gmra.mxu0 %v439
        %v1609 = vpop.f32.mrf.mxu0
        %v1610 = vadd.f32 %v1401, %v1609
        %1611 = vmatmul.f32.gmra.mxu0 %v447
        %v1612 = vpop.f32.mrf.mxu0
        %v1613 = vadd.f32 %v1404, %v1612
        %1614 = vmatmul.f32.gmra.mxu0 %v455
        %v1615 = vpop.f32.mrf.mxu0
        %v1616 = vadd.f32 %v1407, %v1615
        %1617 = vmatmul.f32.gmra.mxu0 %v463
        %v1618 = vpop.f32.mrf.mxu0
        %v1619 = vadd.f32 %v1410, %v1618
        %1620 = vmatmul.f32.gmra.mxu0 %v471
        %v1621 = vpop.f32.mrf.mxu0
        %v1622 = vadd.f32 %v1413, %v1621
        %1623 = vmatmul.f32.gmra.mxu0 %v479
        %v1624 = vpop.f32.mrf.mxu0
        %v1625 = vadd.f32 %v1416, %v1624
        %1626 = vmatmul.f32.gmra.mxu0 %v487
        %v1627 = vpop.f32.mrf.mxu0
        %v1628 = vadd.f32 %v1419, %v1627
        %1629 = vmatmul.f32.gmra.mxu0 %v495
        %v1630 = vpop.f32.mrf.mxu0
        %v1631 = vadd.f32 %v1422, %v1630
        %1632 = vmatmul.f32.gmra.mxu0 %v503
        %v1633 = vpop.f32.mrf.mxu0
        %v1634 = vadd.f32 %v1425, %v1633
        %1635 = vmatmul.f32.gmra.mxu0 %v511
        %v1636 = vpop.f32.mrf.mxu0
        %v1637 = vadd.f32 %v1428, %v1636
        %1638 = vmatmul.f32.gmra.mxu0 %v519
        %v1639 = vpop.f32.mrf.mxu0
        %v1640 = vadd.f32 %v1431, %v1639
        %1641 = vmatmul.f32.gmra.mxu0 %v527
        %v1642 = vpop.f32.mrf.mxu0
        %v1643 = vadd.f32 %v1434, %v1642
        %1644 = vmatmul.f32.gmra.mxu0 %v535
        %v1645 = vpop.f32.mrf.mxu0
        %v1646 = vadd.f32 %v1437, %v1645
        %1647 = vmatmul.f32.gmra.mxu0 %v543
        %v1648 = vpop.f32.mrf.mxu0
        %v1649 = vadd.f32 %v1440, %v1648
        %1650 = vmatmul.f32.gmra.mxu0 %v551
        %v1651 = vpop.f32.mrf.mxu0
        %v1652 = vadd.f32 %v1443, %v1651
        %1653 = vmatmul.f32.gmra.mxu0 %v559
        %v1654 = vpop.f32.mrf.mxu0
        %v1655 = vadd.f32 %v1446, %v1654
        %1656 = vmatmul.f32.gmra.mxu0 %v567
        %v1657 = vpop.f32.mrf.mxu0
        %v1658 = vadd.f32 %v1449, %v1657
        %1659 = vmatmul.f32.gmra.mxu0 %v575
        %v1660 = vpop.f32.mrf.mxu0
        %v1661 = vadd.f32 %v1452, %v1660
        %1662 = vmatmul.f32.gmra.mxu0 %v583
        %v1663 = vpop.f32.mrf.mxu0
        %v1664 = vadd.f32 %v1455, %v1663
        %1665 = vmatmul.f32.gmra.mxu0 %v591
        %v1666 = vpop.f32.mrf.mxu0
        %v1667 = vadd.f32 %v1458, %v1666
        %1668 = vmatmul.f32.gmra.mxu0 %v599
        %v1669 = vpop.f32.mrf.mxu0
        %v1670 = vadd.f32 %v1461, %v1669
        %1671 = vmatmul.f32.gmra.mxu0 %v607
        %v1672 = vpop.f32.mrf.mxu0
        %v1673 = vadd.f32 %v1464, %v1672
        %1674 = vmatmul.f32.gmra.mxu0 %v615
        %v1675 = vpop.f32.mrf.mxu0
        %v1676 = vadd.f32 %v1467, %v1675
        %1677 = vmatmul.f32.gmra.mxu0 %v623
        %v1678 = vpop.f32.mrf.mxu0
        %v1679 = vadd.f32 %v1470, %v1678
        %1680 = vmatmul.f32.gmra.mxu0 %v631
        %v1681 = vpop.f32.mrf.mxu0
        %v1682 = vadd.f32 %v1473, %v1681
        %1683 = vmatmul.f32.gmra.mxu0 %v639
        %v1684 = vpop.f32.mrf.mxu0
        %v1685 = vadd.f32 %v1476, %v1684
        %1686 = vmatmul.f32.gmra.mxu0 %v647
        %v1687 = vpop.f32.mrf.mxu0
        %v1688 = vadd.f32 %v1479, %v1687
        %1689 = vmatmul.f32.gmra.mxu0 %v655
        %v1690 = vpop.f32.mrf.mxu0
        %v1691 = vadd.f32 %v1482, %v1690
        %1692 = vmatmul.f32.gmra.mxu0 %v663
        %v1693 = vpop.f32.mrf.mxu0
        %v1694 = vadd.f32 %v1485, %v1693
        %1695 = vmatmul.f32.gmra.mxu0 %v671
        %v1696 = vpop.f32.mrf.mxu0
        %v1697 = vadd.f32 %v1488, %v1696
        %1698 = vmatmul.f32.gmra.mxu0 %v679
        %v1699 = vpop.f32.mrf.mxu0
        %v1700 = vadd.f32 %v1491, %v1699
        %1701 = vmatmul.f32.gmra.mxu0 %v687
        %v1702 = vpop.f32.mrf.mxu0
        %v1703 = vadd.f32 %v1494, %v1702
        %1704 = vmatmul.f32.gmra.mxu0 %v695
        %v1705 = vpop.f32.mrf.mxu0
        %v1706 = vadd.f32 %v1497, %v1705
        %1707 = vmatmul.f32.gmra.mxu0 %v703
        %v1708 = vpop.f32.mrf.mxu0
        %v1709 = vadd.f32 %v1500, %v1708
        %1710 = vmatmul.f32.gmra.mxu0 %v711
        %v1711 = vpop.f32.mrf.mxu0
        %v1712 = vadd.f32 %v1503, %v1711
        %1713 = vmatmul.f32.gmra.mxu0 %v719
        %v1714 = vpop.f32.mrf.mxu0
        %v1715 = vadd.f32 %v1506, %v1714
        %1716 = vmatmul.f32.gmra.mxu0 %v727
        %v1717 = vpop.f32.mrf.mxu0
        %v1718 = vadd.f32 %v1509, %v1717
        %1719 = vmatmul.f32.gmra.mxu0 %v735
        %v1720 = vpop.f32.mrf.mxu0
        %v1721 = vadd.f32 %v1512, %v1720
        %1722 = vmatmul.f32.gmra.mxu0 %v743
        %v1723 = vpop.f32.mrf.mxu0
        %v1724 = vadd.f32 %v1515, %v1723
        %1725 = vmatmul.f32.gmra.mxu0 %v751
        %v1726 = vpop.f32.mrf.mxu0
        %v1727 = vadd.f32 %v1518, %v1726
        %1728 = vmatmul.f32.gmra.mxu0 %v759
        %v1729 = vpop.f32.mrf.mxu0
        %v1730 = vadd.f32 %v1521, %v1729
        %1731 = vdwg.mxu0
        %1732 = vmatpush.msra.mxu0 %v843
        %1733 = vmatpush.msra.mxu0 %v842
        %1734 = vmatpush.msra.mxu0 %v841
        %1735 = vmatpush.msra.mxu0 %v840
        %1736 = vmatpush.msra.mxu0 %v839
        %1737 = vmatpush.msra.mxu0 %v838
        %1738 = vmatpush.msra.mxu0 %v837
        %1739 = vmatpush.msra.mxu0 %v836
        %1740 = vmatpush.msra.mxu0 %v835
        %1741 = vmatpush.msra.mxu0 %v834
        %1742 = vmatpush.msra.mxu0 %v833
        %1743 = vmatpush.msra.mxu0 %v832
        %1744 = vmatpush.msra.mxu0 %v831
        %1745 = vmatpush.msra.mxu0 %v830
        %1746 = vmatpush.msra.mxu0 %v829
        %1747 = vmatpush.msra.mxu0 %v828
        %1748 = vmatmul.f32.gmra.mxu0 %v256
        %v1749 = vpop.f32.mrf.mxu0
        %v1750 = vadd.f32 %v1541, %v1749
        %1751 = vmatmul.f32.gmra.mxu0 %v264
        %v1752 = vpop.f32.mrf.mxu0
        %v1753 = vadd.f32 %v1544, %v1752
        %1754 = vmatmul.f32.gmra.mxu0 %v272
        %v1755 = vpop.f32.mrf.mxu0
        %v1756 = vadd.f32 %v1547, %v1755
        %1757 = vmatmul.f32.gmra.mxu0 %v280
        %v1758 = vpop.f32.mrf.mxu0
        %v1759 = vadd.f32 %v1550, %v1758
        %1760 = vmatmul.f32.gmra.mxu0 %v288
        %v1761 = vpop.f32.mrf.mxu0
        %v1762 = vadd.f32 %v1553, %v1761
        %1763 = vmatmul.f32.gmra.mxu0 %v296
        %v1764 = vpop.f32.mrf.mxu0
        %v1765 = vadd.f32 %v1556, %v1764
        %1766 = vmatmul.f32.gmra.mxu0 %v304
        %v1767 = vpop.f32.mrf.mxu0
        %v1768 = vadd.f32 %v1559, %v1767
        %1769 = vmatmul.f32.gmra.mxu0 %v312
        %v1770 = vpop.f32.mrf.mxu0
        %v1771 = vadd.f32 %v1562, %v1770
        %1772 = vmatmul.f32.gmra.mxu0 %v320
        %v1773 = vpop.f32.mrf.mxu0
        %v1774 = vadd.f32 %v1565, %v1773
        %1775 = vmatmul.f32.gmra.mxu0 %v328
        %v1776 = vpop.f32.mrf.mxu0
        %v1777 = vadd.f32 %v1568, %v1776
        %1778 = vmatmul.f32.gmra.mxu0 %v336
        %v1779 = vpop.f32.mrf.mxu0
        %v1780 = vadd.f32 %v1571, %v1779
        %1781 = vmatmul.f32.gmra.mxu0 %v344
        %v1782 = vpop.f32.mrf.mxu0
        %v1783 = vadd.f32 %v1574, %v1782
        %1784 = vmatmul.f32.gmra.mxu0 %v352
        %v1785 = vpop.f32.mrf.mxu0
        %v1786 = vadd.f32 %v1577, %v1785
        %1787 = vmatmul.f32.gmra.mxu0 %v360
        %v1788 = vpop.f32.mrf.mxu0
        %v1789 = vadd.f32 %v1580, %v1788
        %1790 = vmatmul.f32.gmra.mxu0 %v368
        %v1791 = vpop.f32.mrf.mxu0
        %v1792 = vadd.f32 %v1583, %v1791
        %1793 = vmatmul.f32.gmra.mxu0 %v376
        %v1794 = vpop.f32.mrf.mxu0
        %v1795 = vadd.f32 %v1586, %v1794
        %1796 = vmatmul.f32.gmra.mxu0 %v384
        %v1797 = vpop.f32.mrf.mxu0
        %v1798 = vadd.f32 %v1589, %v1797
        %1799 = vmatmul.f32.gmra.mxu0 %v392
        %v1800 = vpop.f32.mrf.mxu0
        %v1801 = vadd.f32 %v1592, %v1800
        %1802 = vmatmul.f32.gmra.mxu0 %v400
        %v1803 = vpop.f32.mrf.mxu0
        %v1804 = vadd.f32 %v1595, %v1803
        %1805 = vmatmul.f32.gmra.mxu0 %v408
        %v1806 = vpop.f32.mrf.mxu0
        %v1807 = vadd.f32 %v1598, %v1806
        %1808 = vmatmul.f32.gmra.mxu0 %v416
        %v1809 = vpop.f32.mrf.mxu0
        %v1810 = vadd.f32 %v1601, %v1809
        %1811 = vmatmul.f32.gmra.mxu0 %v424
        %v1812 = vpop.f32.mrf.mxu0
        %v1813 = vadd.f32 %v1604, %v1812
        %1814 = vmatmul.f32.gmra.mxu0 %v432
        %v1815 = vpop.f32.mrf.mxu0
        %v1816 = vadd.f32 %v1607, %v1815
        %1817 = vmatmul.f32.gmra.mxu0 %v440
        %v1818 = vpop.f32.mrf.mxu0
        %v1819 = vadd.f32 %v1610, %v1818
        %1820 = vmatmul.f32.gmra.mxu0 %v448
        %v1821 = vpop.f32.mrf.mxu0
        %v1822 = vadd.f32 %v1613, %v1821
        %1823 = vmatmul.f32.gmra.mxu0 %v456
        %v1824 = vpop.f32.mrf.mxu0
        %v1825 = vadd.f32 %v1616, %v1824
        %1826 = vmatmul.f32.gmra.mxu0 %v464
        %v1827 = vpop.f32.mrf.mxu0
        %v1828 = vadd.f32 %v1619, %v1827
        %1829 = vmatmul.f32.gmra.mxu0 %v472
        %v1830 = vpop.f32.mrf.mxu0
        %v1831 = vadd.f32 %v1622, %v1830
        %1832 = vmatmul.f32.gmra.mxu0 %v480
        %v1833 = vpop.f32.mrf.mxu0
        %v1834 = vadd.f32 %v1625, %v1833
        %1835 = vmatmul.f32.gmra.mxu0 %v488
        %v1836 = vpop.f32.mrf.mxu0
        %v1837 = vadd.f32 %v1628, %v1836
        %1838 = vmatmul.f32.gmra.mxu0 %v496
        %v1839 = vpop.f32.mrf.mxu0
        %v1840 = vadd.f32 %v1631, %v1839
        %1841 = vmatmul.f32.gmra.mxu0 %v504
        %v1842 = vpop.f32.mrf.mxu0
        %v1843 = vadd.f32 %v1634, %v1842
        %1844 = vmatmul.f32.gmra.mxu0 %v512
        %v1845 = vpop.f32.mrf.mxu0
        %v1846 = vadd.f32 %v1637, %v1845
        %1847 = vmatmul.f32.gmra.mxu0 %v520
        %v1848 = vpop.f32.mrf.mxu0
        %v1849 = vadd.f32 %v1640, %v1848
        %1850 = vmatmul.f32.gmra.mxu0 %v528
        %v1851 = vpop.f32.mrf.mxu0
        %v1852 = vadd.f32 %v1643, %v1851
        %1853 = vmatmul.f32.gmra.mxu0 %v536
        %v1854 = vpop.f32.mrf.mxu0
        %v1855 = vadd.f32 %v1646, %v1854
        %1856 = vmatmul.f32.gmra.mxu0 %v544
        %v1857 = vpop.f32.mrf.mxu0
        %v1858 = vadd.f32 %v1649, %v1857
        %1859 = vmatmul.f32.gmra.mxu0 %v552
        %v1860 = vpop.f32.mrf.mxu0
        %v1861 = vadd.f32 %v1652, %v1860
        %1862 = vmatmul.f32.gmra.mxu0 %v560
        %v1863 = vpop.f32.mrf.mxu0
        %v1864 = vadd.f32 %v1655, %v1863
        %1865 = vmatmul.f32.gmra.mxu0 %v568
        %v1866 = vpop.f32.mrf.mxu0
        %v1867 = vadd.f32 %v1658, %v1866
        %1868 = vmatmul.f32.gmra.mxu0 %v576
        %v1869 = vpop.f32.mrf.mxu0
        %v1870 = vadd.f32 %v1661, %v1869
        %1871 = vmatmul.f32.gmra.mxu0 %v584
        %v1872 = vpop.f32.mrf.mxu0
        %v1873 = vadd.f32 %v1664, %v1872
        %1874 = vmatmul.f32.gmra.mxu0 %v592
        %v1875 = vpop.f32.mrf.mxu0
        %v1876 = vadd.f32 %v1667, %v1875
        %1877 = vmatmul.f32.gmra.mxu0 %v600
        %v1878 = vpop.f32.mrf.mxu0
        %v1879 = vadd.f32 %v1670, %v1878
        %1880 = vmatmul.f32.gmra.mxu0 %v608
        %v1881 = vpop.f32.mrf.mxu0
        %v1882 = vadd.f32 %v1673, %v1881
        %1883 = vmatmul.f32.gmra.mxu0 %v616
        %v1884 = vpop.f32.mrf.mxu0
        %v1885 = vadd.f32 %v1676, %v1884
        %1886 = vmatmul.f32.gmra.mxu0 %v624
        %v1887 = vpop.f32.mrf.mxu0
        %v1888 = vadd.f32 %v1679, %v1887
        %1889 = vmatmul.f32.gmra.mxu0 %v632
        %v1890 = vpop.f32.mrf.mxu0
        %v1891 = vadd.f32 %v1682, %v1890
        %1892 = vmatmul.f32.gmra.mxu0 %v640
        %v1893 = vpop.f32.mrf.mxu0
        %v1894 = vadd.f32 %v1685, %v1893
        %1895 = vmatmul.f32.gmra.mxu0 %v648
        %v1896 = vpop.f32.mrf.mxu0
        %v1897 = vadd.f32 %v1688, %v1896
        %1898 = vmatmul.f32.gmra.mxu0 %v656
        %v1899 = vpop.f32.mrf.mxu0
        %v1900 = vadd.f32 %v1691, %v1899
        %1901 = vmatmul.f32.gmra.mxu0 %v664
        %v1902 = vpop.f32.mrf.mxu0
        %v1903 = vadd.f32 %v1694, %v1902
        %1904 = vmatmul.f32.gmra.mxu0 %v672
        %v1905 = vpop.f32.mrf.mxu0
        %v1906 = vadd.f32 %v1697, %v1905
        %1907 = vmatmul.f32.gmra.mxu0 %v680
        %v1908 = vpop.f32.mrf.mxu0
        %v1909 = vadd.f32 %v1700, %v1908
        %1910 = vmatmul.f32.gmra.mxu0 %v688
        %v1911 = vpop.f32.mrf.mxu0
        %v1912 = vadd.f32 %v1703, %v1911
        %1913 = vmatmul.f32.gmra.mxu0 %v696
        %v1914 = vpop.f32.mrf.mxu0
        %v1915 = vadd.f32 %v1706, %v1914
        %1916 = vmatmul.f32.gmra.mxu0 %v704
        %v1917 = vpop.f32.mrf.mxu0
        %v1918 = vadd.f32 %v1709, %v1917
        %1919 = vmatmul.f32.gmra.mxu0 %v712
        %v1920 = vpop.f32.mrf.mxu0
        %v1921 = vadd.f32 %v1712, %v1920
        %1922 = vmatmul.f32.gmra.mxu0 %v720
        %v1923 = vpop.f32.mrf.mxu0
        %v1924 = vadd.f32 %v1715, %v1923
        %1925 = vmatmul.f32.gmra.mxu0 %v728
        %v1926 = vpop.f32.mrf.mxu0
        %v1927 = vadd.f32 %v1718, %v1926
        %1928 = vmatmul.f32.gmra.mxu0 %v736
        %v1929 = vpop.f32.mrf.mxu0
        %v1930 = vadd.f32 %v1721, %v1929
        %1931 = vmatmul.f32.gmra.mxu0 %v744
        %v1932 = vpop.f32.mrf.mxu0
        %v1933 = vadd.f32 %v1724, %v1932
        %1934 = vmatmul.f32.gmra.mxu0 %v752
        %v1935 = vpop.f32.mrf.mxu0
        %v1936 = vadd.f32 %v1727, %v1935
        %1937 = vmatmul.f32.gmra.mxu0 %v760
        %v1938 = vpop.f32.mrf.mxu0
        %v1939 = vadd.f32 %v1730, %v1938
        %1940 = vdwg.mxu0
        %1941 = vmatpush.msra.mxu0 %v859
        %1942 = vmatpush.msra.mxu0 %v858
        %1943 = vmatpush.msra.mxu0 %v857
        %1944 = vmatpush.msra.mxu0 %v856
        %1945 = vmatpush.msra.mxu0 %v855
        %1946 = vmatpush.msra.mxu0 %v854
        %1947 = vmatpush.msra.mxu0 %v853
        %1948 = vmatpush.msra.mxu0 %v852
        %1949 = vmatpush.msra.mxu0 %v851
        %1950 = vmatpush.msra.mxu0 %v850
        %1951 = vmatpush.msra.mxu0 %v849
        %1952 = vmatpush.msra.mxu0 %v848
        %1953 = vmatpush.msra.mxu0 %v847
        %1954 = vmatpush.msra.mxu0 %v846
        %1955 = vmatpush.msra.mxu0 %v845
        %1956 = vmatpush.msra.mxu0 %v844
        %1957 = vmatmul.f32.gmra.mxu0 %v257
        %v1958 = vpop.f32.mrf.mxu0
        %v1959 = vadd.f32 %v1750, %v1958
        %1960 = vmatmul.f32.gmra.mxu0 %v265
        %v1961 = vpop.f32.mrf.mxu0
        %v1962 = vadd.f32 %v1753, %v1961
        %1963 = vmatmul.f32.gmra.mxu0 %v273
        %v1964 = vpop.f32.mrf.mxu0
        %v1965 = vadd.f32 %v1756, %v1964
        %1966 = vmatmul.f32.gmra.mxu0 %v281
        %v1967 = vpop.f32.mrf.mxu0
        %v1968 = vadd.f32 %v1759, %v1967
        %1969 = vmatmul.f32.gmra.mxu0 %v289
        %v1970 = vpop.f32.mrf.mxu0
        %v1971 = vadd.f32 %v1762, %v1970
        %1972 = vmatmul.f32.gmra.mxu0 %v297
        %v1973 = vpop.f32.mrf.mxu0
        %v1974 = vadd.f32 %v1765, %v1973
        %1975 = vmatmul.f32.gmra.mxu0 %v305
        %v1976 = vpop.f32.mrf.mxu0
        %v1977 = vadd.f32 %v1768, %v1976
        %1978 = vmatmul.f32.gmra.mxu0 %v313
        %v1979 = vpop.f32.mrf.mxu0
        %v1980 = vadd.f32 %v1771, %v1979
        %1981 = vmatmul.f32.gmra.mxu0 %v321
        %v1982 = vpop.f32.mrf.mxu0
        %v1983 = vadd.f32 %v1774, %v1982
        %1984 = vmatmul.f32.gmra.mxu0 %v329
        %v1985 = vpop.f32.mrf.mxu0
        %v1986 = vadd.f32 %v1777, %v1985
        %1987 = vmatmul.f32.gmra.mxu0 %v337
        %v1988 = vpop.f32.mrf.mxu0
        %v1989 = vadd.f32 %v1780, %v1988
        %1990 = vmatmul.f32.gmra.mxu0 %v345
        %v1991 = vpop.f32.mrf.mxu0
        %v1992 = vadd.f32 %v1783, %v1991
        %1993 = vmatmul.f32.gmra.mxu0 %v353
        %v1994 = vpop.f32.mrf.mxu0
        %v1995 = vadd.f32 %v1786, %v1994
        %1996 = vmatmul.f32.gmra.mxu0 %v361
        %v1997 = vpop.f32.mrf.mxu0
        %v1998 = vadd.f32 %v1789, %v1997
        %1999 = vmatmul.f32.gmra.mxu0 %v369
        %v2000 = vpop.f32.mrf.mxu0
        %v2001 = vadd.f32 %v1792, %v2000
        %2002 = vmatmul.f32.gmra.mxu0 %v377
        %v2003 = vpop.f32.mrf.mxu0
        %v2004 = vadd.f32 %v1795, %v2003
        %2005 = vmatmul.f32.gmra.mxu0 %v385
        %v2006 = vpop.f32.mrf.mxu0
        %v2007 = vadd.f32 %v1798, %v2006
        %2008 = vmatmul.f32.gmra.mxu0 %v393
        %v2009 = vpop.f32.mrf.mxu0
        %v2010 = vadd.f32 %v1801, %v2009
        %2011 = vmatmul.f32.gmra.mxu0 %v401
        %v2012 = vpop.f32.mrf.mxu0
        %v2013 = vadd.f32 %v1804, %v2012
        %2014 = vmatmul.f32.gmra.mxu0 %v409
        %v2015 = vpop.f32.mrf.mxu0
        %v2016 = vadd.f32 %v1807, %v2015
        %2017 = vmatmul.f32.gmra.mxu0 %v417
        %v2018 = vpop.f32.mrf.mxu0
        %v2019 = vadd.f32 %v1810, %v2018
        %2020 = vmatmul.f32.gmra.mxu0 %v425
        %v2021 = vpop.f32.mrf.mxu0
        %v2022 = vadd.f32 %v1813, %v2021
        %2023 = vmatmul.f32.gmra.mxu0 %v433
        %v2024 = vpop.f32.mrf.mxu0
        %v2025 = vadd.f32 %v1816, %v2024
        %2026 = vmatmul.f32.gmra.mxu0 %v441
        %v2027 = vpop.f32.mrf.mxu0
        %v2028 = vadd.f32 %v1819, %v2027
        %2029 = vmatmul.f32.gmra.mxu0 %v449
        %v2030 = vpop.f32.mrf.mxu0
        %v2031 = vadd.f32 %v1822, %v2030
        %2032 = vmatmul.f32.gmra.mxu0 %v457
        %v2033 = vpop.f32.mrf.mxu0
        %v2034 = vadd.f32 %v1825, %v2033
        %2035 = vmatmul.f32.gmra.mxu0 %v465
        %v2036 = vpop.f32.mrf.mxu0
        %v2037 = vadd.f32 %v1828, %v2036
        %2038 = vmatmul.f32.gmra.mxu0 %v473
        %v2039 = vpop.f32.mrf.mxu0
        %v2040 = vadd.f32 %v1831, %v2039
        %2041 = vmatmul.f32.gmra.mxu0 %v481
        %v2042 = vpop.f32.mrf.mxu0
        %v2043 = vadd.f32 %v1834, %v2042
        %2044 = vmatmul.f32.gmra.mxu0 %v489
        %v2045 = vpop.f32.mrf.mxu0
        %v2046 = vadd.f32 %v1837, %v2045
        %2047 = vmatmul.f32.gmra.mxu0 %v497
        %v2048 = vpop.f32.mrf.mxu0
        %v2049 = vadd.f32 %v1840, %v2048
        %2050 = vmatmul.f32.gmra.mxu0 %v505
        %v2051 = vpop.f32.mrf.mxu0
        %v2052 = vadd.f32 %v1843, %v2051
        %2053 = vmatmul.f32.gmra.mxu0 %v513
        %v2054 = vpop.f32.mrf.mxu0
        %v2055 = vadd.f32 %v1846, %v2054
        %2056 = vmatmul.f32.gmra.mxu0 %v521
        %v2057 = vpop.f32.mrf.mxu0
        %v2058 = vadd.f32 %v1849, %v2057
        %2059 = vmatmul.f32.gmra.mxu0 %v529
        %v2060 = vpop.f32.mrf.mxu0
        %v2061 = vadd.f32 %v1852, %v2060
        %2062 = vmatmul.f32.gmra.mxu0 %v537
        %v2063 = vpop.f32.mrf.mxu0
        %v2064 = vadd.f32 %v1855, %v2063
        %2065 = vmatmul.f32.gmra.mxu0 %v545
        %v2066 = vpop.f32.mrf.mxu0
        %v2067 = vadd.f32 %v1858, %v2066
        %2068 = vmatmul.f32.gmra.mxu0 %v553
        %v2069 = vpop.f32.mrf.mxu0
        %v2070 = vadd.f32 %v1861, %v2069
        %2071 = vmatmul.f32.gmra.mxu0 %v561
        %v2072 = vpop.f32.mrf.mxu0
        %v2073 = vadd.f32 %v1864, %v2072
        %2074 = vmatmul.f32.gmra.mxu0 %v569
        %v2075 = vpop.f32.mrf.mxu0
        %v2076 = vadd.f32 %v1867, %v2075
        %2077 = vmatmul.f32.gmra.mxu0 %v577
        %v2078 = vpop.f32.mrf.mxu0
        %v2079 = vadd.f32 %v1870, %v2078
        %2080 = vmatmul.f32.gmra.mxu0 %v585
        %v2081 = vpop.f32.mrf.mxu0
        %v2082 = vadd.f32 %v1873, %v2081
        %2083 = vmatmul.f32.gmra.mxu0 %v593
        %v2084 = vpop.f32.mrf.mxu0
        %v2085 = vadd.f32 %v1876, %v2084
        %2086 = vmatmul.f32.gmra.mxu0 %v601
        %v2087 = vpop.f32.mrf.mxu0
        %v2088 = vadd.f32 %v1879, %v2087
        %2089 = vmatmul.f32.gmra.mxu0 %v609
        %v2090 = vpop.f32.mrf.mxu0
        %v2091 = vadd.f32 %v1882, %v2090
        %2092 = vmatmul.f32.gmra.mxu0 %v617
        %v2093 = vpop.f32.mrf.mxu0
        %v2094 = vadd.f32 %v1885, %v2093
        %2095 = vmatmul.f32.gmra.mxu0 %v625
        %v2096 = vpop.f32.mrf.mxu0
        %v2097 = vadd.f32 %v1888, %v2096
        %2098 = vmatmul.f32.gmra.mxu0 %v633
        %v2099 = vpop.f32.mrf.mxu0
        %v2100 = vadd.f32 %v1891, %v2099
        %2101 = vmatmul.f32.gmra.mxu0 %v641
        %v2102 = vpop.f32.mrf.mxu0
        %v2103 = vadd.f32 %v1894, %v2102
        %2104 = vmatmul.f32.gmra.mxu0 %v649
        %v2105 = vpop.f32.mrf.mxu0
        %v2106 = vadd.f32 %v1897, %v2105
        %2107 = vmatmul.f32.gmra.mxu0 %v657
        %v2108 = vpop.f32.mrf.mxu0
        %v2109 = vadd.f32 %v1900, %v2108
        %2110 = vmatmul.f32.gmra.mxu0 %v665
        %v2111 = vpop.f32.mrf.mxu0
        %v2112 = vadd.f32 %v1903, %v2111
        %2113 = vmatmul.f32.gmra.mxu0 %v673
        %v2114 = vpop.f32.mrf.mxu0
        %v2115 = vadd.f32 %v1906, %v2114
        %2116 = vmatmul.f32.gmra.mxu0 %v681
        %v2117 = vpop.f32.mrf.mxu0
        %v2118 = vadd.f32 %v1909, %v2117
        %2119 = vmatmul.f32.gmra.mxu0 %v689
        %v2120 = vpop.f32.mrf.mxu0
        %v2121 = vadd.f32 %v1912, %v2120
        %2122 = vmatmul.f32.gmra.mxu0 %v697
        %v2123 = vpop.f32.mrf.mxu0
        %v2124 = vadd.f32 %v1915, %v2123
        %2125 = vmatmul.f32.gmra.mxu0 %v705
        %v2126 = vpop.f32.mrf.mxu0
        %v2127 = vadd.f32 %v1918, %v2126
        %2128 = vmatmul.f32.gmra.mxu0 %v713
        %v2129 = vpop.f32.mrf.mxu0
        %v2130 = vadd.f32 %v1921, %v2129
        %2131 = vmatmul.f32.gmra.mxu0 %v721
        %v2132 = vpop.f32.mrf.mxu0
        %v2133 = vadd.f32 %v1924, %v2132
        %2134 = vmatmul.f32.gmra.mxu0 %v729
        %v2135 = vpop.f32.mrf.mxu0
        %v2136 = vadd.f32 %v1927, %v2135
        %2137 = vmatmul.f32.gmra.mxu0 %v737
        %v2138 = vpop.f32.mrf.mxu0
        %v2139 = vadd.f32 %v1930, %v2138
        %2140 = vmatmul.f32.gmra.mxu0 %v745
        %v2141 = vpop.f32.mrf.mxu0
        %v2142 = vadd.f32 %v1933, %v2141
        %2143 = vmatmul.f32.gmra.mxu0 %v753
        %v2144 = vpop.f32.mrf.mxu0
        %v2145 = vadd.f32 %v1936, %v2144
        %2146 = vmatmul.f32.gmra.mxu0 %v761
        %v2147 = vpop.f32.mrf.mxu0
        %v2148 = vadd.f32 %v1939, %v2147
        %2149 = vdwg.mxu0
        %2150 = vmatpush.msra.mxu0 %v875
        %2151 = vmatpush.msra.mxu0 %v874
        %2152 = vmatpush.msra.mxu0 %v873
        %2153 = vmatpush.msra.mxu0 %v872
        %2154 = vmatpush.msra.mxu0 %v871
        %2155 = vmatpush.msra.mxu0 %v870
        %2156 = vmatpush.msra.mxu0 %v869
        %2157 = vmatpush.msra.mxu0 %v868
        %2158 = vmatpush.msra.mxu0 %v867
        %2159 = vmatpush.msra.mxu0 %v866
        %2160 = vmatpush.msra.mxu0 %v865
        %2161 = vmatpush.msra.mxu0 %v864
        %2162 = vmatpush.msra.mxu0 %v863
        %2163 = vmatpush.msra.mxu0 %v862
        %2164 = vmatpush.msra.mxu0 %v861
        %2165 = vmatpush.msra.mxu0 %v860
        %2166 = vmatmul.f32.gmra.mxu0 %v258
        %v2167 = vpop.f32.mrf.mxu0
        %v2168 = vadd.f32 %v1959, %v2167
        %2169 = vmatmul.f32.gmra.mxu0 %v266
        %v2170 = vpop.f32.mrf.mxu0
        %v2171 = vadd.f32 %v1962, %v2170
        %2172 = vmatmul.f32.gmra.mxu0 %v274
        %v2173 = vpop.f32.mrf.mxu0
        %v2174 = vadd.f32 %v1965, %v2173
        %2175 = vmatmul.f32.gmra.mxu0 %v282
        %v2176 = vpop.f32.mrf.mxu0
        %v2177 = vadd.f32 %v1968, %v2176
        %2178 = vmatmul.f32.gmra.mxu0 %v290
        %v2179 = vpop.f32.mrf.mxu0
        %v2180 = vadd.f32 %v1971, %v2179
        %2181 = vmatmul.f32.gmra.mxu0 %v298
        %v2182 = vpop.f32.mrf.mxu0
        %v2183 = vadd.f32 %v1974, %v2182
        %2184 = vmatmul.f32.gmra.mxu0 %v306
        %v2185 = vpop.f32.mrf.mxu0
        %v2186 = vadd.f32 %v1977, %v2185
        %2187 = vmatmul.f32.gmra.mxu0 %v314
        %v2188 = vpop.f32.mrf.mxu0
        %v2189 = vadd.f32 %v1980, %v2188
        %2190 = vmatmul.f32.gmra.mxu0 %v322
        %v2191 = vpop.f32.mrf.mxu0
        %v2192 = vadd.f32 %v1983, %v2191
        %2193 = vmatmul.f32.gmra.mxu0 %v330
        %v2194 = vpop.f32.mrf.mxu0
        %v2195 = vadd.f32 %v1986, %v2194
        %2196 = vmatmul.f32.gmra.mxu0 %v338
        %v2197 = vpop.f32.mrf.mxu0
        %v2198 = vadd.f32 %v1989, %v2197
        %2199 = vmatmul.f32.gmra.mxu0 %v346
        %v2200 = vpop.f32.mrf.mxu0
        %v2201 = vadd.f32 %v1992, %v2200
        %2202 = vmatmul.f32.gmra.mxu0 %v354
        %v2203 = vpop.f32.mrf.mxu0
        %v2204 = vadd.f32 %v1995, %v2203
        %2205 = vmatmul.f32.gmra.mxu0 %v362
        %v2206 = vpop.f32.mrf.mxu0
        %v2207 = vadd.f32 %v1998, %v2206
        %2208 = vmatmul.f32.gmra.mxu0 %v370
        %v2209 = vpop.f32.mrf.mxu0
        %v2210 = vadd.f32 %v2001, %v2209
        %2211 = vmatmul.f32.gmra.mxu0 %v378
        %v2212 = vpop.f32.mrf.mxu0
        %v2213 = vadd.f32 %v2004, %v2212
        %2214 = vmatmul.f32.gmra.mxu0 %v386
        %v2215 = vpop.f32.mrf.mxu0
        %v2216 = vadd.f32 %v2007, %v2215
        %2217 = vmatmul.f32.gmra.mxu0 %v394
        %v2218 = vpop.f32.mrf.mxu0
        %v2219 = vadd.f32 %v2010, %v2218
        %2220 = vmatmul.f32.gmra.mxu0 %v402
        %v2221 = vpop.f32.mrf.mxu0
        %v2222 = vadd.f32 %v2013, %v2221
        %2223 = vmatmul.f32.gmra.mxu0 %v410
        %v2224 = vpop.f32.mrf.mxu0
        %v2225 = vadd.f32 %v2016, %v2224
        %2226 = vmatmul.f32.gmra.mxu0 %v418
        %v2227 = vpop.f32.mrf.mxu0
        %v2228 = vadd.f32 %v2019, %v2227
        %2229 = vmatmul.f32.gmra.mxu0 %v426
        %v2230 = vpop.f32.mrf.mxu0
        %v2231 = vadd.f32 %v2022, %v2230
        %2232 = vmatmul.f32.gmra.mxu0 %v434
        %v2233 = vpop.f32.mrf.mxu0
        %v2234 = vadd.f32 %v2025, %v2233
        %2235 = vmatmul.f32.gmra.mxu0 %v442
        %v2236 = vpop.f32.mrf.mxu0
        %v2237 = vadd.f32 %v2028, %v2236
        %2238 = vmatmul.f32.gmra.mxu0 %v450
        %v2239 = vpop.f32.mrf.mxu0
        %v2240 = vadd.f32 %v2031, %v2239
        %2241 = vmatmul.f32.gmra.mxu0 %v458
        %v2242 = vpop.f32.mrf.mxu0
        %v2243 = vadd.f32 %v2034, %v2242
        %2244 = vmatmul.f32.gmra.mxu0 %v466
        %v2245 = vpop.f32.mrf.mxu0
        %v2246 = vadd.f32 %v2037, %v2245
        %2247 = vmatmul.f32.gmra.mxu0 %v474
        %v2248 = vpop.f32.mrf.mxu0
        %v2249 = vadd.f32 %v2040, %v2248
        %2250 = vmatmul.f32.gmra.mxu0 %v482
        %v2251 = vpop.f32.mrf.mxu0
        %v2252 = vadd.f32 %v2043, %v2251
        %2253 = vmatmul.f32.gmra.mxu0 %v490
        %v2254 = vpop.f32.mrf.mxu0
        %v2255 = vadd.f32 %v2046, %v2254
        %2256 = vmatmul.f32.gmra.mxu0 %v498
        %v2257 = vpop.f32.mrf.mxu0
        %v2258 = vadd.f32 %v2049, %v2257
        %2259 = vmatmul.f32.gmra.mxu0 %v506
        %v2260 = vpop.f32.mrf.mxu0
        %v2261 = vadd.f32 %v2052, %v2260
        %2262 = vmatmul.f32.gmra.mxu0 %v514
        %v2263 = vpop.f32.mrf.mxu0
        %v2264 = vadd.f32 %v2055, %v2263
        %2265 = vmatmul.f32.gmra.mxu0 %v522
        %v2266 = vpop.f32.mrf.mxu0
        %v2267 = vadd.f32 %v2058, %v2266
        %2268 = vmatmul.f32.gmra.mxu0 %v530
        %v2269 = vpop.f32.mrf.mxu0
        %v2270 = vadd.f32 %v2061, %v2269
        %2271 = vmatmul.f32.gmra.mxu0 %v538
        %v2272 = vpop.f32.mrf.mxu0
        %v2273 = vadd.f32 %v2064, %v2272
        %2274 = vmatmul.f32.gmra.mxu0 %v546
        %v2275 = vpop.f32.mrf.mxu0
        %v2276 = vadd.f32 %v2067, %v2275
        %2277 = vmatmul.f32.gmra.mxu0 %v554
        %v2278 = vpop.f32.mrf.mxu0
        %v2279 = vadd.f32 %v2070, %v2278
        %2280 = vmatmul.f32.gmra.mxu0 %v562
        %v2281 = vpop.f32.mrf.mxu0
        %v2282 = vadd.f32 %v2073, %v2281
        %2283 = vmatmul.f32.gmra.mxu0 %v570
        %v2284 = vpop.f32.mrf.mxu0
        %v2285 = vadd.f32 %v2076, %v2284
        %2286 = vmatmul.f32.gmra.mxu0 %v578
        %v2287 = vpop.f32.mrf.mxu0
        %v2288 = vadd.f32 %v2079, %v2287
        %2289 = vmatmul.f32.gmra.mxu0 %v586
        %v2290 = vpop.f32.mrf.mxu0
        %v2291 = vadd.f32 %v2082, %v2290
        %2292 = vmatmul.f32.gmra.mxu0 %v594
        %v2293 = vpop.f32.mrf.mxu0
        %v2294 = vadd.f32 %v2085, %v2293
        %2295 = vmatmul.f32.gmra.mxu0 %v602
        %v2296 = vpop.f32.mrf.mxu0
        %v2297 = vadd.f32 %v2088, %v2296
        %2298 = vmatmul.f32.gmra.mxu0 %v610
        %v2299 = vpop.f32.mrf.mxu0
        %v2300 = vadd.f32 %v2091, %v2299
        %2301 = vmatmul.f32.gmra.mxu0 %v618
        %v2302 = vpop.f32.mrf.mxu0
        %v2303 = vadd.f32 %v2094, %v2302
        %2304 = vmatmul.f32.gmra.mxu0 %v626
        %v2305 = vpop.f32.mrf.mxu0
        %v2306 = vadd.f32 %v2097, %v2305
        %2307 = vmatmul.f32.gmra.mxu0 %v634
        %v2308 = vpop.f32.mrf.mxu0
        %v2309 = vadd.f32 %v2100, %v2308
        %2310 = vmatmul.f32.gmra.mxu0 %v642
        %v2311 = vpop.f32.mrf.mxu0
        %v2312 = vadd.f32 %v2103, %v2311
        %2313 = vmatmul.f32.gmra.mxu0 %v650
        %v2314 = vpop.f32.mrf.mxu0
        %v2315 = vadd.f32 %v2106, %v2314
        %2316 = vmatmul.f32.gmra.mxu0 %v658
        %v2317 = vpop.f32.mrf.mxu0
        %v2318 = vadd.f32 %v2109, %v2317
        %2319 = vmatmul.f32.gmra.mxu0 %v666
        %v2320 = vpop.f32.mrf.mxu0
        %v2321 = vadd.f32 %v2112, %v2320
        %2322 = vmatmul.f32.gmra.mxu0 %v674
        %v2323 = vpop.f32.mrf.mxu0
        %v2324 = vadd.f32 %v2115, %v2323
        %2325 = vmatmul.f32.gmra.mxu0 %v682
        %v2326 = vpop.f32.mrf.mxu0
        %v2327 = vadd.f32 %v2118, %v2326
        %2328 = vmatmul.f32.gmra.mxu0 %v690
        %v2329 = vpop.f32.mrf.mxu0
        %v2330 = vadd.f32 %v2121, %v2329
        %2331 = vmatmul.f32.gmra.mxu0 %v698
        %v2332 = vpop.f32.mrf.mxu0
        %v2333 = vadd.f32 %v2124, %v2332
        %2334 = vmatmul.f32.gmra.mxu0 %v706
        %v2335 = vpop.f32.mrf.mxu0
        %v2336 = vadd.f32 %v2127, %v2335
        %2337 = vmatmul.f32.gmra.mxu0 %v714
        %v2338 = vpop.f32.mrf.mxu0
        %v2339 = vadd.f32 %v2130, %v2338
        %2340 = vmatmul.f32.gmra.mxu0 %v722
        %v2341 = vpop.f32.mrf.mxu0
        %v2342 = vadd.f32 %v2133, %v2341
        %2343 = vmatmul.f32.gmra.mxu0 %v730
        %v2344 = vpop.f32.mrf.mxu0
        %v2345 = vadd.f32 %v2136, %v2344
        %2346 = vmatmul.f32.gmra.mxu0 %v738
        %v2347 = vpop.f32.mrf.mxu0
        %v2348 = vadd.f32 %v2139, %v2347
        %2349 = vmatmul.f32.gmra.mxu0 %v746
        %v2350 = vpop.f32.mrf.mxu0
        %v2351 = vadd.f32 %v2142, %v2350
        %2352 = vmatmul.f32.gmra.mxu0 %v754
        %v2353 = vpop.f32.mrf.mxu0
        %v2354 = vadd.f32 %v2145, %v2353
        %2355 = vmatmul.f32.gmra.mxu0 %v762
        %v2356 = vpop.f32.mrf.mxu0
        %v2357 = vadd.f32 %v2148, %v2356
        %2358 = vdwg.mxu0
        %2359 = vmatpush.msra.mxu0 %v891
        %2360 = vmatpush.msra.mxu0 %v890
        %2361 = vmatpush.msra.mxu0 %v889
        %2362 = vmatpush.msra.mxu0 %v888
        %2363 = vmatpush.msra.mxu0 %v887
        %2364 = vmatpush.msra.mxu0 %v886
        %2365 = vmatpush.msra.mxu0 %v885
        %2366 = vmatpush.msra.mxu0 %v884
        %2367 = vmatpush.msra.mxu0 %v883
        %2368 = vmatpush.msra.mxu0 %v882
        %2369 = vmatpush.msra.mxu0 %v881
        %2370 = vmatpush.msra.mxu0 %v880
        %2371 = vmatpush.msra.mxu0 %v879
        %2372 = vmatpush.msra.mxu0 %v878
        %2373 = vmatpush.msra.mxu0 %v877
        %2374 = vmatpush.msra.mxu0 %v876
        %2375 = vmatmul.f32.gmra.mxu0 %v259
        %v2376 = vpop.f32.mrf.mxu0
        %v2377 = vadd.f32 %v2168, %v2376
        %2378 = vmatmul.f32.gmra.mxu0 %v267
        %v2379 = vpop.f32.mrf.mxu0
        %v2380 = vadd.f32 %v2171, %v2379
        %2381 = vmatmul.f32.gmra.mxu0 %v275
        %v2382 = vpop.f32.mrf.mxu0
        %v2383 = vadd.f32 %v2174, %v2382
        %2384 = vmatmul.f32.gmra.mxu0 %v283
        %v2385 = vpop.f32.mrf.mxu0
        %v2386 = vadd.f32 %v2177, %v2385
        %2387 = vmatmul.f32.gmra.mxu0 %v291
        %v2388 = vpop.f32.mrf.mxu0
        %v2389 = vadd.f32 %v2180, %v2388
        %2390 = vmatmul.f32.gmra.mxu0 %v299
        %v2391 = vpop.f32.mrf.mxu0
        %v2392 = vadd.f32 %v2183, %v2391
        %2393 = vmatmul.f32.gmra.mxu0 %v307
        %v2394 = vpop.f32.mrf.mxu0
        %v2395 = vadd.f32 %v2186, %v2394
        %2396 = vmatmul.f32.gmra.mxu0 %v315
        %v2397 = vpop.f32.mrf.mxu0
        %v2398 = vadd.f32 %v2189, %v2397
        %2399 = vmatmul.f32.gmra.mxu0 %v323
        %v2400 = vpop.f32.mrf.mxu0
        %v2401 = vadd.f32 %v2192, %v2400
        %2402 = vmatmul.f32.gmra.mxu0 %v331
        %v2403 = vpop.f32.mrf.mxu0
        %v2404 = vadd.f32 %v2195, %v2403
        %2405 = vmatmul.f32.gmra.mxu0 %v339
        %v2406 = vpop.f32.mrf.mxu0
        %v2407 = vadd.f32 %v2198, %v2406
        %2408 = vmatmul.f32.gmra.mxu0 %v347
        %v2409 = vpop.f32.mrf.mxu0
        %v2410 = vadd.f32 %v2201, %v2409
        %2411 = vmatmul.f32.gmra.mxu0 %v355
        %v2412 = vpop.f32.mrf.mxu0
        %v2413 = vadd.f32 %v2204, %v2412
        %2414 = vmatmul.f32.gmra.mxu0 %v363
        %v2415 = vpop.f32.mrf.mxu0
        %v2416 = vadd.f32 %v2207, %v2415
        %2417 = vmatmul.f32.gmra.mxu0 %v371
        %v2418 = vpop.f32.mrf.mxu0
        %v2419 = vadd.f32 %v2210, %v2418
        %2420 = vmatmul.f32.gmra.mxu0 %v379
        %v2421 = vpop.f32.mrf.mxu0
        %v2422 = vadd.f32 %v2213, %v2421
        %2423 = vmatmul.f32.gmra.mxu0 %v387
        %v2424 = vpop.f32.mrf.mxu0
        %v2425 = vadd.f32 %v2216, %v2424
        %2426 = vmatmul.f32.gmra.mxu0 %v395
        %v2427 = vpop.f32.mrf.mxu0
        %v2428 = vadd.f32 %v2219, %v2427
        %2429 = vmatmul.f32.gmra.mxu0 %v403
        %v2430 = vpop.f32.mrf.mxu0
        %v2431 = vadd.f32 %v2222, %v2430
        %2432 = vmatmul.f32.gmra.mxu0 %v411
        %v2433 = vpop.f32.mrf.mxu0
        %v2434 = vadd.f32 %v2225, %v2433
        %2435 = vmatmul.f32.gmra.mxu0 %v419
        %v2436 = vpop.f32.mrf.mxu0
        %v2437 = vadd.f32 %v2228, %v2436
        %2438 = vmatmul.f32.gmra.mxu0 %v427
        %v2439 = vpop.f32.mrf.mxu0
        %v2440 = vadd.f32 %v2231, %v2439
        %2441 = vmatmul.f32.gmra.mxu0 %v435
        %v2442 = vpop.f32.mrf.mxu0
        %v2443 = vadd.f32 %v2234, %v2442
        %2444 = vmatmul.f32.gmra.mxu0 %v443
        %v2445 = vpop.f32.mrf.mxu0
        %v2446 = vadd.f32 %v2237, %v2445
        %2447 = vmatmul.f32.gmra.mxu0 %v451
        %v2448 = vpop.f32.mrf.mxu0
        %v2449 = vadd.f32 %v2240, %v2448
        %2450 = vmatmul.f32.gmra.mxu0 %v459
        %v2451 = vpop.f32.mrf.mxu0
        %v2452 = vadd.f32 %v2243, %v2451
        %2453 = vmatmul.f32.gmra.mxu0 %v467
        %v2454 = vpop.f32.mrf.mxu0
        %v2455 = vadd.f32 %v2246, %v2454
        %2456 = vmatmul.f32.gmra.mxu0 %v475
        %v2457 = vpop.f32.mrf.mxu0
        %v2458 = vadd.f32 %v2249, %v2457
        %2459 = vmatmul.f32.gmra.mxu0 %v483
        %v2460 = vpop.f32.mrf.mxu0
        %v2461 = vadd.f32 %v2252, %v2460
        %2462 = vmatmul.f32.gmra.mxu0 %v491
        %v2463 = vpop.f32.mrf.mxu0
        %v2464 = vadd.f32 %v2255, %v2463
        %2465 = vmatmul.f32.gmra.mxu0 %v499
        %v2466 = vpop.f32.mrf.mxu0
        %v2467 = vadd.f32 %v2258, %v2466
        %2468 = vmatmul.f32.gmra.mxu0 %v507
        %v2469 = vpop.f32.mrf.mxu0
        %v2470 = vadd.f32 %v2261, %v2469
        %2471 = vmatmul.f32.gmra.mxu0 %v515
        %v2472 = vpop.f32.mrf.mxu0
        %v2473 = vadd.f32 %v2264, %v2472
        %2474 = vmatmul.f32.gmra.mxu0 %v523
        %v2475 = vpop.f32.mrf.mxu0
        %v2476 = vadd.f32 %v2267, %v2475
        %2477 = vmatmul.f32.gmra.mxu0 %v531
        %v2478 = vpop.f32.mrf.mxu0
        %v2479 = vadd.f32 %v2270, %v2478
        %2480 = vmatmul.f32.gmra.mxu0 %v539
        %v2481 = vpop.f32.mrf.mxu0
        %v2482 = vadd.f32 %v2273, %v2481
        %2483 = vmatmul.f32.gmra.mxu0 %v547
        %v2484 = vpop.f32.mrf.mxu0
        %v2485 = vadd.f32 %v2276, %v2484
        %2486 = vmatmul.f32.gmra.mxu0 %v555
        %v2487 = vpop.f32.mrf.mxu0
        %v2488 = vadd.f32 %v2279, %v2487
        %2489 = vmatmul.f32.gmra.mxu0 %v563
        %v2490 = vpop.f32.mrf.mxu0
        %v2491 = vadd.f32 %v2282, %v2490
        %2492 = vmatmul.f32.gmra.mxu0 %v571
        %v2493 = vpop.f32.mrf.mxu0
        %v2494 = vadd.f32 %v2285, %v2493
        %2495 = vmatmul.f32.gmra.mxu0 %v579
        %v2496 = vpop.f32.mrf.mxu0
        %v2497 = vadd.f32 %v2288, %v2496
        %2498 = vmatmul.f32.gmra.mxu0 %v587
        %v2499 = vpop.f32.mrf.mxu0
        %v2500 = vadd.f32 %v2291, %v2499
        %2501 = vmatmul.f32.gmra.mxu0 %v595
        %v2502 = vpop.f32.mrf.mxu0
        %v2503 = vadd.f32 %v2294, %v2502
        %2504 = vmatmul.f32.gmra.mxu0 %v603
        %v2505 = vpop.f32.mrf.mxu0
        %v2506 = vadd.f32 %v2297, %v2505
        %2507 = vmatmul.f32.gmra.mxu0 %v611
        %v2508 = vpop.f32.mrf.mxu0
        %v2509 = vadd.f32 %v2300, %v2508
        %2510 = vmatmul.f32.gmra.mxu0 %v619
        %v2511 = vpop.f32.mrf.mxu0
        %v2512 = vadd.f32 %v2303, %v2511
        %2513 = vmatmul.f32.gmra.mxu0 %v627
        %v2514 = vpop.f32.mrf.mxu0
        %v2515 = vadd.f32 %v2306, %v2514
        %2516 = vmatmul.f32.gmra.mxu0 %v635
        %v2517 = vpop.f32.mrf.mxu0
        %v2518 = vadd.f32 %v2309, %v2517
        %2519 = vmatmul.f32.gmra.mxu0 %v643
        %v2520 = vpop.f32.mrf.mxu0
        %v2521 = vadd.f32 %v2312, %v2520
        %2522 = vmatmul.f32.gmra.mxu0 %v651
        %v2523 = vpop.f32.mrf.mxu0
        %v2524 = vadd.f32 %v2315, %v2523
        %2525 = vmatmul.f32.gmra.mxu0 %v659
        %v2526 = vpop.f32.mrf.mxu0
        %v2527 = vadd.f32 %v2318, %v2526
        %2528 = vmatmul.f32.gmra.mxu0 %v667
        %v2529 = vpop.f32.mrf.mxu0
        %v2530 = vadd.f32 %v2321, %v2529
        %2531 = vmatmul.f32.gmra.mxu0 %v675
        %v2532 = vpop.f32.mrf.mxu0
        %v2533 = vadd.f32 %v2324, %v2532
        %2534 = vmatmul.f32.gmra.mxu0 %v683
        %v2535 = vpop.f32.mrf.mxu0
        %v2536 = vadd.f32 %v2327, %v2535
        %2537 = vmatmul.f32.gmra.mxu0 %v691
        %v2538 = vpop.f32.mrf.mxu0
        %v2539 = vadd.f32 %v2330, %v2538
        %2540 = vmatmul.f32.gmra.mxu0 %v699
        %v2541 = vpop.f32.mrf.mxu0
        %v2542 = vadd.f32 %v2333, %v2541
        %2543 = vmatmul.f32.gmra.mxu0 %v707
        %v2544 = vpop.f32.mrf.mxu0
        %v2545 = vadd.f32 %v2336, %v2544
        %2546 = vmatmul.f32.gmra.mxu0 %v715
        %v2547 = vpop.f32.mrf.mxu0
        %v2548 = vadd.f32 %v2339, %v2547
        %2549 = vmatmul.f32.gmra.mxu0 %v723
        %v2550 = vpop.f32.mrf.mxu0
        %v2551 = vadd.f32 %v2342, %v2550
        %2552 = vmatmul.f32.gmra.mxu0 %v731
        %v2553 = vpop.f32.mrf.mxu0
        %v2554 = vadd.f32 %v2345, %v2553
        %2555 = vmatmul.f32.gmra.mxu0 %v739
        %v2556 = vpop.f32.mrf.mxu0
        %v2557 = vadd.f32 %v2348, %v2556
        %2558 = vmatmul.f32.gmra.mxu0 %v747
        %v2559 = vpop.f32.mrf.mxu0
        %v2560 = vadd.f32 %v2351, %v2559
        %2561 = vmatmul.f32.gmra.mxu0 %v755
        %v2562 = vpop.f32.mrf.mxu0
        %v2563 = vadd.f32 %v2354, %v2562
        %2564 = vmatmul.f32.gmra.mxu0 %v763
        %v2565 = vpop.f32.mrf.mxu0
        %v2566 = vadd.f32 %v2357, %v2565
        %2567 = vdwg.mxu0
        %2568 = vst [vmem:[%s249] sm:$0xff] %v2377
        %2569 = vst [vmem:[%s249 + $0x8] sm:$0xff] %v2380
        %2570 = vst [vmem:[%s249 + $0x10] sm:$0xff] %v2383
        %2571 = vst [vmem:[%s249 + $0x18] sm:$0xff] %v2386
        %2572 = vst [vmem:[%s249 + $0x20] sm:$0xff] %v2389
        %2573 = vst [vmem:[%s249 + $0x28] sm:$0xff] %v2392
        %2574 = vst [vmem:[%s249 + $0x30] sm:$0xff] %v2395
        %2575 = vst [vmem:[%s249 + $0x38] sm:$0xff] %v2398
        %2576 = vst [vmem:[%s249 + $0x40] sm:$0xff] %v2401
        %2577 = vst [vmem:[%s249 + $0x48] sm:$0xff] %v2404
        %2578 = vst [vmem:[%s249 + $0x50] sm:$0xff] %v2407
        %2579 = vst [vmem:[%s249 + $0x58] sm:$0xff] %v2410
        %2580 = vst [vmem:[%s249 + $0x60] sm:$0xff] %v2413
        %2581 = vst [vmem:[%s249 + $0x68] sm:$0xff] %v2416
        %2582 = vst [vmem:[%s249 + $0x70] sm:$0xff] %v2419
        %2583 = vst [vmem:[%s249 + $0x78] sm:$0xff] %v2422
        %2584 = vst [vmem:[%s249 + $0x80] sm:$0xff] %v2425
        %2585 = vst [vmem:[%s249 + $0x88] sm:$0xff] %v2428
        %2586 = vst [vmem:[%s249 + $0x90] sm:$0xff] %v2431
        %2587 = vst [vmem:[%s249 + $0x98] sm:$0xff] %v2434
        %2588 = vst [vmem:[%s249 + $0xa0] sm:$0xff] %v2437
        %2589 = vst [vmem:[%s249 + $0xa8] sm:$0xff] %v2440
        %2590 = vst [vmem:[%s249 + $0xb0] sm:$0xff] %v2443
        %2591 = vst [vmem:[%s249 + $0xb8] sm:$0xff] %v2446
        %2592 = vst [vmem:[%s249 + $0xc0] sm:$0xff] %v2449
        %2593 = vst [vmem:[%s249 + $0xc8] sm:$0xff] %v2452
        %2594 = vst [vmem:[%s249 + $0xd0] sm:$0xff] %v2455
        %2595 = vst [vmem:[%s249 + $0xd8] sm:$0xff] %v2458
        %2596 = vst [vmem:[%s249 + $0xe0] sm:$0xff] %v2461
        %2597 = vst [vmem:[%s249 + $0xe8] sm:$0xff] %v2464
        %2598 = vst [vmem:[%s249 + $0xf0] sm:$0xff] %v2467
        %2599 = vst [vmem:[%s249 + $0xf8] sm:$0xff] %v2470
        %2600 = vst [vmem:[%s249 + $0x100] sm:$0xff] %v2473
        %2601 = vst [vmem:[%s249 + $0x108] sm:$0xff] %v2476
        %2602 = vst [vmem:[%s249 + $0x110] sm:$0xff] %v2479
        %2603 = vst [vmem:[%s249 + $0x118] sm:$0xff] %v2482
        %2604 = vst [vmem:[%s249 + $0x120] sm:$0xff] %v2485
        %2605 = vst [vmem:[%s249 + $0x128] sm:$0xff] %v2488
        %2606 = vst [vmem:[%s249 + $0x130] sm:$0xff] %v2491
        %2607 = vst [vmem:[%s249 + $0x138] sm:$0xff] %v2494
        %2608 = vst [vmem:[%s249 + $0x140] sm:$0xff] %v2497
        %2609 = vst [vmem:[%s249 + $0x148] sm:$0xff] %v2500
        %2610 = vst [vmem:[%s249 + $0x150] sm:$0xff] %v2503
        %2611 = vst [vmem:[%s249 + $0x158] sm:$0xff] %v2506
        %2612 = vst [vmem:[%s249 + $0x160] sm:$0xff] %v2509
        %2613 = vst [vmem:[%s249 + $0x168] sm:$0xff] %v2512
        %2614 = vst [vmem:[%s249 + $0x170] sm:$0xff] %v2515
        %2615 = vst [vmem:[%s249 + $0x178] sm:$0xff] %v2518
        %2616 = vst [vmem:[%s249 + $0x180] sm:$0xff] %v2521
        %2617 = vst [vmem:[%s249 + $0x188] sm:$0xff] %v2524
        %2618 = vst [vmem:[%s249 + $0x190] sm:$0xff] %v2527
        %2619 = vst [vmem:[%s249 + $0x198] sm:$0xff] %v2530
        %2620 = vst [vmem:[%s249 + $0x1a0] sm:$0xff] %v2533
        %2621 = vst [vmem:[%s249 + $0x1a8] sm:$0xff] %v2536
        %2622 = vst [vmem:[%s249 + $0x1b0] sm:$0xff] %v2539
        %2623 = vst [vmem:[%s249 + $0x1b8] sm:$0xff] %v2542
        %2624 = vst [vmem:[%s249 + $0x1c0] sm:$0xff] %v2545
        %2625 = vst [vmem:[%s249 + $0x1c8] sm:$0xff] %v2548
        %2626 = vst [vmem:[%s249 + $0x1d0] sm:$0xff] %v2551
        %2627 = vst [vmem:[%s249 + $0x1d8] sm:$0xff] %v2554
        %2628 = vst [vmem:[%s249 + $0x1e0] sm:$0xff] %v2557
        %2629 = vst [vmem:[%s249 + $0x1e8] sm:$0xff] %v2560
        %2630 = vst [vmem:[%s249 + $0x1f0] sm:$0xff] %v2563
        %2631 = vst [vmem:[%s249 + $0x1f8] sm:$0xff] %v2566
        %s2632 = sand.u32 %s121, 1
        %s2633 = scalar_lea.sflag [#allocation4], %s2632
        %s2634 = sand.u32 %s121, 1
        %s2635 = smul.addr %s2634, 512
        %s2636 = scalar_lea.vmem [#allocation8], %s2635
        // Predicated region
        $region45: #{tpu_custom_call.1} parent=31 // pred_check
          %p2637 = pneg %p131
        $region46: #{tpu_custom_call.1} parent=31 // pred_check_branch
          %2639 = sbr.rel (%p2637) target = $region48
        $region47: #{tpu_custom_call.1} parent=31 // pred_region
          %s2640 = smul.u32 64, %s25
          %2642 = vsyncadd %s2633, 0
          %s2643 = sadd.s32 %s26, %s2640
          %s2644 = smul.addr %s2643, 8
          %s2645 = scalar_lea.hbm %s3, %s2644
          %s2646 = sshll.u32 %s2636, 4
          %s2647 = int_to_ptr.vmem [resolvable:$true] %s2646
          %s2648 = sshll.u32 %s2645, 4
          %s2649 = int_to_ptr.hbm [resolvable:$true] %s2648
          %2654 = dma.vmem_to_hbm [thread:$0]  %s2647, 8192, %s2649, %s2633, 128, 128, 8
        $region48: #{tpu_custom_call.1} parent=31 // pred_fallthru
          _
      $region32: #{tpu_custom_call.1} parent=5 // pred_fallthru
        _
      %p2655 = scmp.le.s32.totalorder 2, %s16
      // Predicated region
      $region49: #{tpu_custom_call.1} parent=5 // pred_check
        %p2656 = pneg %p2655
      $region50: #{tpu_custom_call.1} parent=5 // pred_check_branch
        %2658 = sbr.rel (%p2656) target = $region52
      $region51: #{tpu_custom_call.1} parent=5 // pred_region
        %s2659 = ssub.s32 %s16, 2
        // Predicated region
        $region53: #{tpu_custom_call.1} parent=51 // pred_check
          %p2660 = pneg %p137
        $region54: #{tpu_custom_call.1} parent=51 // pred_check_branch
          %2662 = sbr.rel (%p2660) target = $region56
        $region55: #{tpu_custom_call.1} parent=51 // pred_region
          %s2663 = sand.u32 %s122, 1
          %s2664 = scalar_lea.sflag [#allocation4], %s2663
          %s2665 = sand.u32 %s122, 1
          %s2666 = smul.addr %s2665, 512
          %s2667 = scalar_lea.vmem [#allocation8], %s2666
          %2669 = dma.done %s2664, 8192
        $region56: #{tpu_custom_call.1} parent=51 // pred_fallthru
          _
      $region52: #{tpu_custom_call.1} parent=5 // pred_fallthru
        _
    $region6: #{tpu_custom_call.1} parent=1 // loop_footer
      %s20 = sadd.s32 1, %s16
    $region7: #{tpu_custom_call.1} parent=1 // loop_footer_branch
      %15 = sbr.rel target = $region3
    $region8: #{tpu_custom_call.1} parent=1 // loop_exit
      _
    %2670 = vsyncpa [#allocation3], 1
    %s2671 = scalar_lea.sflag [#allocation3], 1
    %2672 = vsyncpa %s2671, 1
    %2673 = vsyncpa [#allocation6], 1
    %2674 = vsyncpa [#allocation4], 1
    %s2675 = scalar_lea.sflag [#allocation4], 1
    %2676 = vsyncpa %s2675, 1

</llo_original>
